<compile_context>
chip_gen: v7x
topology: tpu7x:2x2x1
jax: 0.10.0
libtpu: 0.0.40
codegen_flags: <defaults>
</compile_context>

<pallas_src>
import functools

import jax
import jax.numpy as jnp
import numpy as np
from jax.experimental import pallas as pl
from jax.experimental.pallas import tpu as pltpu


def _transblock_kernel(
    x_ref,
    ln1_g_ref, ln1_b_ref,
    wqkv_ref, bqkv_ref,
    w0h_ref, b0_ref,
    ln2_g_ref, ln2_b_ref,
    w1_ref, b1_ref,
    w2_ref, b2_ref,
    o_ref,
    *,
    batch: int,
    n_heads: int,
    eps: float = 1e-5,
):
    """Whole TransBlock in one grid step. Activations are [B*N, D] in VMEM."""
    f32 = jnp.float32
    bf16 = jnp.bfloat16

    x = x_ref[...]                           # [B*N, D] f32
    BN, D = x.shape
    B = batch
    N = BN // B
    H = n_heads

    # Hoisted parameter reads (each broadcast happens exactly once).
    g1, be1 = ln1_g_ref[...], ln1_b_ref[...]
    g2, be2 = ln2_g_ref[...], ln2_b_ref[...]
    b_qkv = bqkv_ref[...]
    b_w0 = b0_ref[...]
    b_w1 = b1_ref[...]
    b_w2 = b2_ref[...]

    def layernorm(v, g, b):
        mu = jnp.mean(v, axis=-1, keepdims=True)
        var = jnp.mean((v - mu) ** 2, axis=-1, keepdims=True)
        return (v - mu) * jax.lax.rsqrt(var + eps) * g + b

    # ---- LayerNorm 1 (f32) --------------------------------------------------
    xn = layernorm(x, g1, be1)

    # ---- QKV projection: one MXU matmul over all B*N rows --------------------
    qkv = jnp.dot(xn.astype(bf16), wqkv_ref[...],
                  preferred_element_type=f32) + b_qkv        # [B*N, 3*H*D] f32

    def head(block, h):
        """Per-head q/k/v slice, reshaped to [B, N, D] (leading split only)."""
        c0 = (block * H + h) * D
        return qkv[:, c0:c0 + D].reshape(B, N, D).astype(bf16)

    # ---- MHSA: attention batched over B, W0 applied per head (no concat) -----
    scale = float(D) ** -0.5
    mhsa = jnp.zeros((BN, D), f32)
    for h in range(H):                       # static unroll, H is small
        qh, kh, vh = head(0, h), head(1, h), head(2, h)
        # scores contract the last dims directly -> no k.T / XLU transpose
        s = jnp.einsum("bnd,bmd->bnm", qh, kh,
                       preferred_element_type=f32) * scale    # [B, N, N] f32
        s = s - jnp.max(s, axis=-1, keepdims=True)
        p = jnp.exp(s)
        p = p * pl.reciprocal(jnp.sum(p, axis=-1, keepdims=True), approx=True)
        av = jnp.einsum("bnm,bmd->bnd", p.astype(bf16), vh,
                        preferred_element_type=f32)           # [B, N, D] f32
        mhsa = mhsa + jnp.dot(av.reshape(BN, D).astype(bf16), w0h_ref[h],
                              preferred_element_type=f32)
    mhsa = mhsa + b_w0
    r1 = mhsa + x                            # residual 1 (f32)

    # ---- LayerNorm 2 + MLP ----------------------------------------------------
    rn = layernorm(r1, g2, be2)
    h1 = jnp.dot(rn.astype(bf16), w1_ref[...], preferred_element_type=f32) + b_w1
    h1 = jnp.maximum(h1, 0.0)
    # TODO(synk): nn.Dropout(0.25) layers are identity (inference mode).
    mlp = jnp.dot(h1.astype(bf16), w2_ref[...], preferred_element_type=f32) + b_w2

    o_ref[...] = mlp + r1                    # residual 2, [B*N, D] f32


def trans_block(x, params, n_heads):
    """x: [B, N, D] float32. params: dict of f32 weights (see init_params)."""
    B, N, D = x.shape
    bf16 = jnp.bfloat16

    x2d = x.reshape(B * N, D)
    # bf16 MXU operands; W0 pre-split per head so the kernel indexes heads along
    # a leading axis instead of concatenating head outputs along lanes.
    w0h = params["w0"].reshape(n_heads, D, D).astype(bf16)

    args = (
        x2d,
        params["ln1_g"], params["ln1_b"],
        params["wqkv"].astype(bf16), params["bqkv"],
        w0h, params["b0"],
        params["ln2_g"], params["ln2_b"],
        params["w1"].astype(bf16), params["b1"],
        params["w2"].astype(bf16), params["b2"],
    )

    def full_spec(a):
        nd = a.ndim
        return pl.BlockSpec(a.shape, lambda i, _nd=nd: (0,) * _nd)

    kernel = functools.partial(_transblock_kernel, batch=B, n_heads=n_heads)
    out2d = pl.pallas_call(
        kernel,
        out_shape=jax.ShapeDtypeStruct((B * N, D), jnp.float32),
        grid_spec=pltpu.PrefetchScalarGridSpec(
            num_scalar_prefetch=0,
            grid=(1,),                       # whole (tiny) problem in one step
            in_specs=[full_spec(a) for a in args],
            out_specs=pl.BlockSpec((B * N, D), lambda i: (0, 0)),
        ),
        compiler_params=pltpu.CompilerParams(
            dimension_semantics=("arbitrary",),
        ),
    )(*args)
    return out2d.reshape(B, N, D)


def init_params(key, in_dim, out_dim, n_heads):
    """Deterministic synthetic params matching TransBlock.__init__ shapes.
    Linear weights stored as [in, out] (transpose of torch layout), float32."""
    ks = jax.random.split(key, 6)
    qkv_out = 3 * in_dim * n_heads
    s = 0.02
    return {
        "ln1_g": jnp.ones((1, in_dim), jnp.float32),
        "ln1_b": jnp.zeros((1, in_dim), jnp.float32),
        "wqkv": s * jax.random.normal(ks[0], (in_dim, qkv_out), jnp.float32),
        "bqkv": s * jax.random.normal(ks[1], (1, qkv_out), jnp.float32),
        "w0": s * jax.random.normal(ks[2], (n_heads * in_dim, in_dim), jnp.float32),
        "b0": s * jax.random.normal(ks[3], (1, in_dim), jnp.float32),
        "ln2_g": jnp.ones((1, in_dim), jnp.float32),
        "ln2_b": jnp.zeros((1, in_dim), jnp.float32),
        "w1": s * jax.random.normal(ks[4], (in_dim, out_dim), jnp.float32),
        "b1": jnp.zeros((1, out_dim), jnp.float32),
        "w2": s * jax.random.normal(ks[5], (out_dim, in_dim), jnp.float32),
        "b2": jnp.zeros((1, in_dim), jnp.float32),
    }


def trans_block_ref(x, p, n_heads, eps=1e-5):
    """Pure-JAX f32 reference for numerical validation."""
    def ln(v, g, b):
        mu = jnp.mean(v, axis=-1, keepdims=True)
        var = jnp.mean((v - mu) ** 2, axis=-1, keepdims=True)
        return (v - mu) / jnp.sqrt(var + eps) * g[0] + b[0]

    B, N, D = x.shape
    xn = ln(x, p["ln1_g"], p["ln1_b"])
    qkv = xn @ p["wqkv"] + p["bqkv"][0]
    q, k, v = jnp.split(qkv, 3, axis=-1)                           # [B, N, H*D]
    def to_heads(t):
        return t.reshape(B, N, n_heads, D).transpose(0, 2, 1, 3)   # [B, H, N, D]
    q, k, v = map(to_heads, (q, k, v))
    score = jnp.einsum("bhnq,bhtq->bhnt", q, k) * (D ** -0.5)
    attn = jax.nn.softmax(score, axis=-1)
    av = jnp.einsum("bhgn,bhnq->bhgq", attn, v)                    # [B, H, N, D]
    av = av.transpose(0, 2, 1, 3).reshape(B, N, n_heads * D)
    mhsa = av @ p["w0"] + p["b0"][0]
    r1 = mhsa + x
    rn = ln(r1, p["ln2_g"], p["ln2_b"])
    h1 = jnp.maximum(rn @ p["w1"] + p["b1"][0], 0.0)
    mlp = h1 @ p["w2"] + p["b2"][0]
    return mlp + r1


if __name__ == "__main__":
    B, N, D = 2, 8, 32       # b_size, n_seq, in_dim
    OUT_DIM = 64             # MLP hidden (out_dim)
    H = 4                    # n_heads

    key = jax.random.PRNGKey(0)
    kx, kp = jax.random.split(key)
    x = jax.random.normal(kx, (B, N, D), jnp.float32)
    params = init_params(kp, D, OUT_DIM, H)

    out = trans_block(x, params, H)
    out = jax.block_until_ready(out)

    ref = trans_block_ref(x, params, H)
    # Loosened tolerance: kernel uses bf16 MXU operands (f32 accumulation) and
    # an approximate (EUP) softmax reciprocal; expected deviation ~1e-3.
    np.testing.assert_allclose(np.asarray(out), np.asarray(ref), rtol=2e-2, atol=2e-2)

    print("KERNEL_OK")
</pallas_src>

<mosaic_0001>
module attributes {stable_mosaic.version = 11 : i64} {
  func.func @_transblock_kernel(%arg0: i32, %arg1: memref<16x32xf32, #tpu.memory_space<vmem>>, %arg2: memref<1x32xf32, #tpu.memory_space<vmem>>, %arg3: memref<1x32xf32, #tpu.memory_space<vmem>>, %arg4: memref<32x384xbf16, #tpu.memory_space<vmem>>, %arg5: memref<1x384xf32, #tpu.memory_space<vmem>>, %arg6: memref<4x32x32xbf16, #tpu.memory_space<vmem>>, %arg7: memref<1x32xf32, #tpu.memory_space<vmem>>, %arg8: memref<1x32xf32, #tpu.memory_space<vmem>>, %arg9: memref<1x32xf32, #tpu.memory_space<vmem>>, %arg10: memref<32x64xbf16, #tpu.memory_space<vmem>>, %arg11: memref<1x64xf32, #tpu.memory_space<vmem>>, %arg12: memref<64x32xbf16, #tpu.memory_space<vmem>>, %arg13: memref<1x32xf32, #tpu.memory_space<vmem>>, %arg14: memref<16x32xf32, #tpu.memory_space<vmem>>) attributes {dimension_semantics = [#tpu.dimension_semantics<arbitrary>], iteration_bounds = array<i64: 1>, scalar_prefetch = 0 : i64, scratch_operands = 0 : i64, tpu.core_type = #tpu.core_type<tc>, window_params = [{pipeline_mode = #tpu.pipeline_mode<synchronous>, transform_indices = @transform_0, window_bounds = array<i64: 16, 32>}, {pipeline_mode = #tpu.pipeline_mode<synchronous>, transform_indices = @transform_1, window_bounds = array<i64: 1, 32>}, {pipeline_mode = #tpu.pipeline_mode<synchronous>, transform_indices = @transform_2, window_bounds = array<i64: 1, 32>}, {pipeline_mode = #tpu.pipeline_mode<synchronous>, transform_indices = @transform_3, window_bounds = array<i64: 32, 384>}, {pipeline_mode = #tpu.pipeline_mode<synchronous>, transform_indices = @transform_4, window_bounds = array<i64: 1, 384>}, {pipeline_mode = #tpu.pipeline_mode<synchronous>, transform_indices = @transform_5, window_bounds = array<i64: 4, 32, 32>}, {pipeline_mode = #tpu.pipeline_mode<synchronous>, transform_indices = @transform_6, window_bounds = array<i64: 1, 32>}, {pipeline_mode = #tpu.pipeline_mode<synchronous>, transform_indices = @transform_7, window_bounds = array<i64: 1, 32>}, {pipeline_mode = #tpu.pipeline_mode<synchronous>, transform_indices = @transform_8, window_bounds = array<i64: 1, 32>}, {pipeline_mode = #tpu.pipeline_mode<synchronous>, transform_indices = @transform_9, window_bounds = array<i64: 32, 64>}, {pipeline_mode = #tpu.pipeline_mode<synchronous>, transform_indices = @transform_10, window_bounds = array<i64: 1, 64>}, {pipeline_mode = #tpu.pipeline_mode<synchronous>, transform_indices = @transform_11, window_bounds = array<i64: 64, 32>}, {pipeline_mode = #tpu.pipeline_mode<synchronous>, transform_indices = @transform_12, window_bounds = array<i64: 1, 32>}, {pipeline_mode = #tpu.pipeline_mode<synchronous>, transform_indices = @transform_13, window_bounds = array<i64: 16, 32>}]} {
    %c0 = arith.constant 0 : index
    %c0_0 = arith.constant 0 : index
    %0 = vector.load %arg1[%c0, %c0_0] : memref<16x32xf32, #tpu.memory_space<vmem>>, vector<16x32xf32>
    %c0_1 = arith.constant 0 : index
    %c0_2 = arith.constant 0 : index
    %1 = vector.load %arg2[%c0_1, %c0_2] : memref<1x32xf32, #tpu.memory_space<vmem>>, vector<1x32xf32>
    %c0_3 = arith.constant 0 : index
    %c0_4 = arith.constant 0 : index
    %2 = vector.load %arg3[%c0_3, %c0_4] : memref<1x32xf32, #tpu.memory_space<vmem>>, vector<1x32xf32>
    %c0_5 = arith.constant 0 : index
    %c0_6 = arith.constant 0 : index
    %3 = vector.load %arg8[%c0_5, %c0_6] : memref<1x32xf32, #tpu.memory_space<vmem>>, vector<1x32xf32>
    %c0_7 = arith.constant 0 : index
    %c0_8 = arith.constant 0 : index
    %4 = vector.load %arg9[%c0_7, %c0_8] : memref<1x32xf32, #tpu.memory_space<vmem>>, vector<1x32xf32>
    %c0_9 = arith.constant 0 : index
    %c0_10 = arith.constant 0 : index
    %5 = vector.load %arg5[%c0_9, %c0_10] : memref<1x384xf32, #tpu.memory_space<vmem>>, vector<1x384xf32>
    %c0_11 = arith.constant 0 : index
    %c0_12 = arith.constant 0 : index
    %6 = vector.load %arg7[%c0_11, %c0_12] : memref<1x32xf32, #tpu.memory_space<vmem>>, vector<1x32xf32>
    %c0_13 = arith.constant 0 : index
    %c0_14 = arith.constant 0 : index
    %7 = vector.load %arg11[%c0_13, %c0_14] : memref<1x64xf32, #tpu.memory_space<vmem>>, vector<1x64xf32>
    %c0_15 = arith.constant 0 : index
    %c0_16 = arith.constant 0 : index
    %8 = vector.load %arg13[%c0_15, %c0_16] : memref<1x32xf32, #tpu.memory_space<vmem>>, vector<1x32xf32>
    %cst = arith.constant dense<0.000000e+00> : vector<16xf32>
    %9 = vector.multi_reduction <add>, %0, %cst [1] : vector<16x32xf32> to vector<16xf32>
    %10 = vector.shape_cast %9 : vector<16xf32> to vector<16x1xf32>
    %cst_17 = arith.constant 3.200000e+01 : f32
    %11 = vector.broadcast %cst_17 : f32 to vector<16x1xf32>
    %12 = arith.divf %10, %11 : vector<16x1xf32>
    %13 = vector.broadcast %12 : vector<16x1xf32> to vector<16x32xf32>
    %14 = arith.subf %0, %13 : vector<16x32xf32>
    %15 = arith.mulf %14, %14 : vector<16x32xf32>
    %cst_18 = arith.constant dense<0.000000e+00> : vector<16xf32>
    %16 = vector.multi_reduction <add>, %15, %cst_18 [1] : vector<16x32xf32> to vector<16xf32>
    %17 = vector.shape_cast %16 : vector<16xf32> to vector<16x1xf32>
    %cst_19 = arith.constant 3.200000e+01 : f32
    %18 = vector.broadcast %cst_19 : f32 to vector<16x1xf32>
    %19 = arith.divf %17, %18 : vector<16x1xf32>
    %20 = vector.broadcast %12 : vector<16x1xf32> to vector<16x32xf32>
    %21 = arith.subf %0, %20 : vector<16x32xf32>
    %cst_20 = arith.constant 9.99999974E-6 : f32
    %22 = vector.broadcast %cst_20 : f32 to vector<16x1xf32>
    %23 = arith.addf %19, %22 : vector<16x1xf32>
    %24 = math.rsqrt %23 : vector<16x1xf32>
    %25 = vector.broadcast %24 : vector<16x1xf32> to vector<16x32xf32>
    %26 = arith.mulf %21, %25 : vector<16x32xf32>
    %27 = vector.broadcast %1 : vector<1x32xf32> to vector<16x32xf32>
    %28 = arith.mulf %26, %27 : vector<16x32xf32>
    %29 = vector.broadcast %2 : vector<1x32xf32> to vector<16x32xf32>
    %30 = arith.addf %28, %29 : vector<16x32xf32>
    %31 = arith.truncf %30 : vector<16x32xf32> to vector<16x32xbf16>
    %c0_21 = arith.constant 0 : index
    %c0_22 = arith.constant 0 : index
    %32 = vector.load %arg4[%c0_21, %c0_22] : memref<32x384xbf16, #tpu.memory_space<vmem>>, vector<32x384xbf16>
    %cst_23 = arith.constant dense<0.000000e+00> : vector<16x384xf32>
    %33 = tpu.matmul %31, %32, %cst_23 {dimension_numbers = #tpu.dot_dimension_numbers<[1], [0], [0], [1], [0, 0, 1, 1], [], []>} : vector<16x32xbf16>, vector<32x384xbf16>, vector<16x384xf32> -> vector<16x384xf32>
    %34 = vector.broadcast %5 : vector<1x384xf32> to vector<16x384xf32>
    %35 = arith.addf %33, %34 : vector<16x384xf32>
    %cst_24 = arith.constant 0.000000e+00 : f32
    %36 = vector.broadcast %cst_24 : f32 to vector<16x32xf32>
    %37 = vector.extract_strided_slice %35 {offsets = [0, 0], sizes = [16, 32], strides = [1, 1]} : vector<16x384xf32> to vector<16x32xf32>
    %38 = vector.shape_cast %37 : vector<16x32xf32> to vector<2x8x32xf32>
    %39 = arith.truncf %38 : vector<2x8x32xf32> to vector<2x8x32xbf16>
    %40 = vector.extract_strided_slice %35 {offsets = [0, 128], sizes = [16, 32], strides = [1, 1]} : vector<16x384xf32> to vector<16x32xf32>
    %41 = vector.shape_cast %40 : vector<16x32xf32> to vector<2x8x32xf32>
    %42 = arith.truncf %41 : vector<2x8x32xf32> to vector<2x8x32xbf16>
    %43 = vector.extract_strided_slice %35 {offsets = [0, 256], sizes = [16, 32], strides = [1, 1]} : vector<16x384xf32> to vector<16x32xf32>
    %44 = vector.shape_cast %43 : vector<16x32xf32> to vector<2x8x32xf32>
    %45 = arith.truncf %44 : vector<2x8x32xf32> to vector<2x8x32xbf16>
    "tpu.trace_start"() <{level = 10 : i32, message = "bnd,bmd->bnm"}> : () -> ()
    %cst_25 = arith.constant dense<0.000000e+00> : vector<2x8x8xf32>
    %46 = tpu.matmul %39, %42, %cst_25 {dimension_numbers = #tpu.dot_dimension_numbers<[2], [2], [1], [1], [0, 0, 0, 1, 1, 1], [0], [0]>} : vector<2x8x32xbf16>, vector<2x8x32xbf16>, vector<2x8x8xf32> -> vector<2x8x8xf32>
    "tpu.trace_stop"() : () -> ()
    %cst_26 = arith.constant 0.176776692 : f32
    %47 = vector.broadcast %cst_26 : f32 to vector<2x8x8xf32>
    %48 = arith.mulf %46, %47 : vector<2x8x8xf32>
    %cst_27 = arith.constant dense<0xFF800000> : vector<2x8xf32>
    %49 = vector.multi_reduction <maximumf>, %48, %cst_27 [2] : vector<2x8x8xf32> to vector<2x8xf32>
    %50 = vector.shape_cast %49 : vector<2x8xf32> to vector<2x8x1xf32>
    %51 = vector.broadcast %50 : vector<2x8x1xf32> to vector<2x8x8xf32>
    %52 = arith.subf %48, %51 : vector<2x8x8xf32>
    %53 = math.exp %52 : vector<2x8x8xf32>
    %cst_28 = arith.constant dense<0.000000e+00> : vector<2x8xf32>
    %54 = vector.multi_reduction <add>, %53, %cst_28 [2] : vector<2x8x8xf32> to vector<2x8xf32>
    %55 = vector.shape_cast %54 : vector<2x8xf32> to vector<2x8x1xf32>
    %56 = tpu.reciprocal %55 {approx = true} : vector<2x8x1xf32> -> vector<2x8x1xf32>
    %57 = vector.broadcast %56 : vector<2x8x1xf32> to vector<2x8x8xf32>
    %58 = arith.mulf %53, %57 : vector<2x8x8xf32>
    %59 = arith.truncf %58 : vector<2x8x8xf32> to vector<2x8x8xbf16>
    "tpu.trace_start"() <{level = 10 : i32, message = "bnm,bmd->bnd"}> : () -> ()
    %cst_29 = arith.constant dense<0.000000e+00> : vector<2x8x32xf32>
    %60 = tpu.matmul %59, %45, %cst_29 {dimension_numbers = #tpu.dot_dimension_numbers<[2], [1], [1], [2], [0, 0, 0, 1, 1, 2], [0], [0]>} : vector<2x8x8xbf16>, vector<2x8x32xbf16>, vector<2x8x32xf32> -> vector<2x8x32xf32>
    "tpu.trace_stop"() : () -> ()
    %61 = vector.shape_cast %60 : vector<2x8x32xf32> to vector<16x32xf32>
    %62 = arith.truncf %61 : vector<16x32xf32> to vector<16x32xbf16>
    %c0_30 = arith.constant 0 : index
    %c0_31 = arith.constant 0 : index
    %c0_32 = arith.constant 0 : index
    %63 = vector.load %arg6[%c0_30, %c0_31, %c0_32] : memref<4x32x32xbf16, #tpu.memory_space<vmem>>, vector<1x32x32xbf16>
    %64 = vector.shape_cast %63 : vector<1x32x32xbf16> to vector<32x32xbf16>
    %cst_33 = arith.constant dense<0.000000e+00> : vector<16x32xf32>
    %65 = tpu.matmul %62, %64, %cst_33 {dimension_numbers = #tpu.dot_dimension_numbers<[1], [0], [0], [1], [0, 0, 1, 1], [], []>} : vector<16x32xbf16>, vector<32x32xbf16>, vector<16x32xf32> -> vector<16x32xf32>
    %66 = arith.addf %36, %65 : vector<16x32xf32>
    %67 = vector.extract_strided_slice %35 {offsets = [0, 32], sizes = [16, 32], strides = [1, 1]} : vector<16x384xf32> to vector<16x32xf32>
    %68 = vector.shape_cast %67 : vector<16x32xf32> to vector<2x8x32xf32>
    %69 = arith.truncf %68 : vector<2x8x32xf32> to vector<2x8x32xbf16>
    %70 = vector.extract_strided_slice %35 {offsets = [0, 160], sizes = [16, 32], strides = [1, 1]} : vector<16x384xf32> to vector<16x32xf32>
    %71 = vector.shape_cast %70 : vector<16x32xf32> to vector<2x8x32xf32>
    %72 = arith.truncf %71 : vector<2x8x32xf32> to vector<2x8x32xbf16>
    %73 = vector.extract_strided_slice %35 {offsets = [0, 288], sizes = [16, 32], strides = [1, 1]} : vector<16x384xf32> to vector<16x32xf32>
    %74 = vector.shape_cast %73 : vector<16x32xf32> to vector<2x8x32xf32>
    %75 = arith.truncf %74 : vector<2x8x32xf32> to vector<2x8x32xbf16>
    "tpu.trace_start"() <{level = 10 : i32, message = "bnd,bmd->bnm"}> : () -> ()
    %cst_34 = arith.constant dense<0.000000e+00> : vector<2x8x8xf32>
    %76 = tpu.matmul %69, %72, %cst_34 {dimension_numbers = #tpu.dot_dimension_numbers<[2], [2], [1], [1], [0, 0, 0, 1, 1, 1], [0], [0]>} : vector<2x8x32xbf16>, vector<2x8x32xbf16>, vector<2x8x8xf32> -> vector<2x8x8xf32>
    "tpu.trace_stop"() : () -> ()
    %cst_35 = arith.constant 0.176776692 : f32
    %77 = vector.broadcast %cst_35 : f32 to vector<2x8x8xf32>
    %78 = arith.mulf %76, %77 : vector<2x8x8xf32>
    %cst_36 = arith.constant dense<0xFF800000> : vector<2x8xf32>
    %79 = vector.multi_reduction <maximumf>, %78, %cst_36 [2] : vector<2x8x8xf32> to vector<2x8xf32>
    %80 = vector.shape_cast %79 : vector<2x8xf32> to vector<2x8x1xf32>
    %81 = vector.broadcast %80 : vector<2x8x1xf32> to vector<2x8x8xf32>
    %82 = arith.subf %78, %81 : vector<2x8x8xf32>
    %83 = math.exp %82 : vector<2x8x8xf32>
    %cst_37 = arith.constant dense<0.000000e+00> : vector<2x8xf32>
    %84 = vector.multi_reduction <add>, %83, %cst_37 [2] : vector<2x8x8xf32> to vector<2x8xf32>
    %85 = vector.shape_cast %84 : vector<2x8xf32> to vector<2x8x1xf32>
    %86 = tpu.reciprocal %85 {approx = true} : vector<2x8x1xf32> -> vector<2x8x1xf32>
    %87 = vector.broadcast %86 : vector<2x8x1xf32> to vector<2x8x8xf32>
    %88 = arith.mulf %83, %87 : vector<2x8x8xf32>
    %89 = arith.truncf %88 : vector<2x8x8xf32> to vector<2x8x8xbf16>
    "tpu.trace_start"() <{level = 10 : i32, message = "bnm,bmd->bnd"}> : () -> ()
    %cst_38 = arith.constant dense<0.000000e+00> : vector<2x8x32xf32>
    %90 = tpu.matmul %89, %75, %cst_38 {dimension_numbers = #tpu.dot_dimension_numbers<[2], [1], [1], [2], [0, 0, 0, 1, 1, 2], [0], [0]>} : vector<2x8x8xbf16>, vector<2x8x32xbf16>, vector<2x8x32xf32> -> vector<2x8x32xf32>
    "tpu.trace_stop"() : () -> ()
    %91 = vector.shape_cast %90 : vector<2x8x32xf32> to vector<16x32xf32>
    %92 = arith.truncf %91 : vector<16x32xf32> to vector<16x32xbf16>
    %c1 = arith.constant 1 : index
    %c0_39 = arith.constant 0 : index
    %c0_40 = arith.constant 0 : index
    %93 = vector.load %arg6[%c1, %c0_39, %c0_40] : memref<4x32x32xbf16, #tpu.memory_space<vmem>>, vector<1x32x32xbf16>
    %94 = vector.shape_cast %93 : vector<1x32x32xbf16> to vector<32x32xbf16>
    %cst_41 = arith.constant dense<0.000000e+00> : vector<16x32xf32>
    %95 = tpu.matmul %92, %94, %cst_41 {dimension_numbers = #tpu.dot_dimension_numbers<[1], [0], [0], [1], [0, 0, 1, 1], [], []>} : vector<16x32xbf16>, vector<32x32xbf16>, vector<16x32xf32> -> vector<16x32xf32>
    %96 = arith.addf %66, %95 : vector<16x32xf32>
    %97 = vector.extract_strided_slice %35 {offsets = [0, 64], sizes = [16, 32], strides = [1, 1]} : vector<16x384xf32> to vector<16x32xf32>
    %98 = vector.shape_cast %97 : vector<16x32xf32> to vector<2x8x32xf32>
    %99 = arith.truncf %98 : vector<2x8x32xf32> to vector<2x8x32xbf16>
    %100 = vector.extract_strided_slice %35 {offsets = [0, 192], sizes = [16, 32], strides = [1, 1]} : vector<16x384xf32> to vector<16x32xf32>
    %101 = vector.shape_cast %100 : vector<16x32xf32> to vector<2x8x32xf32>
    %102 = arith.truncf %101 : vector<2x8x32xf32> to vector<2x8x32xbf16>
    %103 = vector.extract_strided_slice %35 {offsets = [0, 320], sizes = [16, 32], strides = [1, 1]} : vector<16x384xf32> to vector<16x32xf32>
    %104 = vector.shape_cast %103 : vector<16x32xf32> to vector<2x8x32xf32>
    %105 = arith.truncf %104 : vector<2x8x32xf32> to vector<2x8x32xbf16>
    "tpu.trace_start"() <{level = 10 : i32, message = "bnd,bmd->bnm"}> : () -> ()
    %cst_42 = arith.constant dense<0.000000e+00> : vector<2x8x8xf32>
    %106 = tpu.matmul %99, %102, %cst_42 {dimension_numbers = #tpu.dot_dimension_numbers<[2], [2], [1], [1], [0, 0, 0, 1, 1, 1], [0], [0]>} : vector<2x8x32xbf16>, vector<2x8x32xbf16>, vector<2x8x8xf32> -> vector<2x8x8xf32>
    "tpu.trace_stop"() : () -> ()
    %cst_43 = arith.constant 0.176776692 : f32
    %107 = vector.broadcast %cst_43 : f32 to vector<2x8x8xf32>
    %108 = arith.mulf %106, %107 : vector<2x8x8xf32>
    %cst_44 = arith.constant dense<0xFF800000> : vector<2x8xf32>
    %109 = vector.multi_reduction <maximumf>, %108, %cst_44 [2] : vector<2x8x8xf32> to vector<2x8xf32>
    %110 = vector.shape_cast %109 : vector<2x8xf32> to vector<2x8x1xf32>
    %111 = vector.broadcast %110 : vector<2x8x1xf32> to vector<2x8x8xf32>
    %112 = arith.subf %108, %111 : vector<2x8x8xf32>
    %113 = math.exp %112 : vector<2x8x8xf32>
    %cst_45 = arith.constant dense<0.000000e+00> : vector<2x8xf32>
    %114 = vector.multi_reduction <add>, %113, %cst_45 [2] : vector<2x8x8xf32> to vector<2x8xf32>
    %115 = vector.shape_cast %114 : vector<2x8xf32> to vector<2x8x1xf32>
    %116 = tpu.reciprocal %115 {approx = true} : vector<2x8x1xf32> -> vector<2x8x1xf32>
    %117 = vector.broadcast %116 : vector<2x8x1xf32> to vector<2x8x8xf32>
    %118 = arith.mulf %113, %117 : vector<2x8x8xf32>
    %119 = arith.truncf %118 : vector<2x8x8xf32> to vector<2x8x8xbf16>
    "tpu.trace_start"() <{level = 10 : i32, message = "bnm,bmd->bnd"}> : () -> ()
    %cst_46 = arith.constant dense<0.000000e+00> : vector<2x8x32xf32>
    %120 = tpu.matmul %119, %105, %cst_46 {dimension_numbers = #tpu.dot_dimension_numbers<[2], [1], [1], [2], [0, 0, 0, 1, 1, 2], [0], [0]>} : vector<2x8x8xbf16>, vector<2x8x32xbf16>, vector<2x8x32xf32> -> vector<2x8x32xf32>
    "tpu.trace_stop"() : () -> ()
    %121 = vector.shape_cast %120 : vector<2x8x32xf32> to vector<16x32xf32>
    %122 = arith.truncf %121 : vector<16x32xf32> to vector<16x32xbf16>
    %c2 = arith.constant 2 : index
    %c0_47 = arith.constant 0 : index
    %c0_48 = arith.constant 0 : index
    %123 = vector.load %arg6[%c2, %c0_47, %c0_48] : memref<4x32x32xbf16, #tpu.memory_space<vmem>>, vector<1x32x32xbf16>
    %124 = vector.shape_cast %123 : vector<1x32x32xbf16> to vector<32x32xbf16>
    %cst_49 = arith.constant dense<0.000000e+00> : vector<16x32xf32>
    %125 = tpu.matmul %122, %124, %cst_49 {dimension_numbers = #tpu.dot_dimension_numbers<[1], [0], [0], [1], [0, 0, 1, 1], [], []>} : vector<16x32xbf16>, vector<32x32xbf16>, vector<16x32xf32> -> vector<16x32xf32>
    %126 = arith.addf %96, %125 : vector<16x32xf32>
    %127 = vector.extract_strided_slice %35 {offsets = [0, 96], sizes = [16, 32], strides = [1, 1]} : vector<16x384xf32> to vector<16x32xf32>
    %128 = vector.shape_cast %127 : vector<16x32xf32> to vector<2x8x32xf32>
    %129 = arith.truncf %128 : vector<2x8x32xf32> to vector<2x8x32xbf16>
    %130 = vector.extract_strided_slice %35 {offsets = [0, 224], sizes = [16, 32], strides = [1, 1]} : vector<16x384xf32> to vector<16x32xf32>
    %131 = vector.shape_cast %130 : vector<16x32xf32> to vector<2x8x32xf32>
    %132 = arith.truncf %131 : vector<2x8x32xf32> to vector<2x8x32xbf16>
    %133 = vector.extract_strided_slice %35 {offsets = [0, 352], sizes = [16, 32], strides = [1, 1]} : vector<16x384xf32> to vector<16x32xf32>
    %134 = vector.shape_cast %133 : vector<16x32xf32> to vector<2x8x32xf32>
    %135 = arith.truncf %134 : vector<2x8x32xf32> to vector<2x8x32xbf16>
    "tpu.trace_start"() <{level = 10 : i32, message = "bnd,bmd->bnm"}> : () -> ()
    %cst_50 = arith.constant dense<0.000000e+00> : vector<2x8x8xf32>
    %136 = tpu.matmul %129, %132, %cst_50 {dimension_numbers = #tpu.dot_dimension_numbers<[2], [2], [1], [1], [0, 0, 0, 1, 1, 1], [0], [0]>} : vector<2x8x32xbf16>, vector<2x8x32xbf16>, vector<2x8x8xf32> -> vector<2x8x8xf32>
    "tpu.trace_stop"() : () -> ()
    %cst_51 = arith.constant 0.176776692 : f32
    %137 = vector.broadcast %cst_51 : f32 to vector<2x8x8xf32>
    %138 = arith.mulf %136, %137 : vector<2x8x8xf32>
    %cst_52 = arith.constant dense<0xFF800000> : vector<2x8xf32>
    %139 = vector.multi_reduction <maximumf>, %138, %cst_52 [2] : vector<2x8x8xf32> to vector<2x8xf32>
    %140 = vector.shape_cast %139 : vector<2x8xf32> to vector<2x8x1xf32>
    %141 = vector.broadcast %140 : vector<2x8x1xf32> to vector<2x8x8xf32>
    %142 = arith.subf %138, %141 : vector<2x8x8xf32>
    %143 = math.exp %142 : vector<2x8x8xf32>
    %cst_53 = arith.constant dense<0.000000e+00> : vector<2x8xf32>
    %144 = vector.multi_reduction <add>, %143, %cst_53 [2] : vector<2x8x8xf32> to vector<2x8xf32>
    %145 = vector.shape_cast %144 : vector<2x8xf32> to vector<2x8x1xf32>
    %146 = tpu.reciprocal %145 {approx = true} : vector<2x8x1xf32> -> vector<2x8x1xf32>
    %147 = vector.broadcast %146 : vector<2x8x1xf32> to vector<2x8x8xf32>
    %148 = arith.mulf %143, %147 : vector<2x8x8xf32>
    %149 = arith.truncf %148 : vector<2x8x8xf32> to vector<2x8x8xbf16>
    "tpu.trace_start"() <{level = 10 : i32, message = "bnm,bmd->bnd"}> : () -> ()
    %cst_54 = arith.constant dense<0.000000e+00> : vector<2x8x32xf32>
    %150 = tpu.matmul %149, %135, %cst_54 {dimension_numbers = #tpu.dot_dimension_numbers<[2], [1], [1], [2], [0, 0, 0, 1, 1, 2], [0], [0]>} : vector<2x8x8xbf16>, vector<2x8x32xbf16>, vector<2x8x32xf32> -> vector<2x8x32xf32>
    "tpu.trace_stop"() : () -> ()
    %151 = vector.shape_cast %150 : vector<2x8x32xf32> to vector<16x32xf32>
    %152 = arith.truncf %151 : vector<16x32xf32> to vector<16x32xbf16>
    %c3 = arith.constant 3 : index
    %c0_55 = arith.constant 0 : index
    %c0_56 = arith.constant 0 : index
    %153 = vector.load %arg6[%c3, %c0_55, %c0_56] : memref<4x32x32xbf16, #tpu.memory_space<vmem>>, vector<1x32x32xbf16>
    %154 = vector.shape_cast %153 : vector<1x32x32xbf16> to vector<32x32xbf16>
    %cst_57 = arith.constant dense<0.000000e+00> : vector<16x32xf32>
    %155 = tpu.matmul %152, %154, %cst_57 {dimension_numbers = #tpu.dot_dimension_numbers<[1], [0], [0], [1], [0, 0, 1, 1], [], []>} : vector<16x32xbf16>, vector<32x32xbf16>, vector<16x32xf32> -> vector<16x32xf32>
    %156 = arith.addf %126, %155 : vector<16x32xf32>
    %157 = vector.broadcast %6 : vector<1x32xf32> to vector<16x32xf32>
    %158 = arith.addf %156, %157 : vector<16x32xf32>
    %159 = arith.addf %158, %0 : vector<16x32xf32>
    %cst_58 = arith.constant dense<0.000000e+00> : vector<16xf32>
    %160 = vector.multi_reduction <add>, %159, %cst_58 [1] : vector<16x32xf32> to vector<16xf32>
    %161 = vector.shape_cast %160 : vector<16xf32> to vector<16x1xf32>
    %cst_59 = arith.constant 3.200000e+01 : f32
    %162 = vector.broadcast %cst_59 : f32 to vector<16x1xf32>
    %163 = arith.divf %161, %162 : vector<16x1xf32>
    %164 = vector.broadcast %163 : vector<16x1xf32> to vector<16x32xf32>
    %165 = arith.subf %159, %164 : vector<16x32xf32>
    %166 = arith.mulf %165, %165 : vector<16x32xf32>
    %cst_60 = arith.constant dense<0.000000e+00> : vector<16xf32>
    %167 = vector.multi_reduction <add>, %166, %cst_60 [1] : vector<16x32xf32> to vector<16xf32>
    %168 = vector.shape_cast %167 : vector<16xf32> to vector<16x1xf32>
    %cst_61 = arith.constant 3.200000e+01 : f32
    %169 = vector.broadcast %cst_61 : f32 to vector<16x1xf32>
    %170 = arith.divf %168, %169 : vector<16x1xf32>
    %171 = vector.broadcast %163 : vector<16x1xf32> to vector<16x32xf32>
    %172 = arith.subf %159, %171 : vector<16x32xf32>
    %cst_62 = arith.constant 9.99999974E-6 : f32
    %173 = vector.broadcast %cst_62 : f32 to vector<16x1xf32>
    %174 = arith.addf %170, %173 : vector<16x1xf32>
    %175 = math.rsqrt %174 : vector<16x1xf32>
    %176 = vector.broadcast %175 : vector<16x1xf32> to vector<16x32xf32>
    %177 = arith.mulf %172, %176 : vector<16x32xf32>
    %178 = vector.broadcast %3 : vector<1x32xf32> to vector<16x32xf32>
    %179 = arith.mulf %177, %178 : vector<16x32xf32>
    %180 = vector.broadcast %4 : vector<1x32xf32> to vector<16x32xf32>
    %181 = arith.addf %179, %180 : vector<16x32xf32>
    %182 = arith.truncf %181 : vector<16x32xf32> to vector<16x32xbf16>
    %c0_63 = arith.constant 0 : index
    %c0_64 = arith.constant 0 : index
    %183 = vector.load %arg10[%c0_63, %c0_64] : memref<32x64xbf16, #tpu.memory_space<vmem>>, vector<32x64xbf16>
    %cst_65 = arith.constant dense<0.000000e+00> : vector<16x64xf32>
    %184 = tpu.matmul %182, %183, %cst_65 {dimension_numbers = #tpu.dot_dimension_numbers<[1], [0], [0], [1], [0, 0, 1, 1], [], []>} : vector<16x32xbf16>, vector<32x64xbf16>, vector<16x64xf32> -> vector<16x64xf32>
    %185 = vector.broadcast %7 : vector<1x64xf32> to vector<16x64xf32>
    %186 = arith.addf %184, %185 : vector<16x64xf32>
    %cst_66 = arith.constant 0.000000e+00 : f32
    %187 = vector.broadcast %cst_66 : f32 to vector<16x64xf32>
    %188 = arith.maximumf %186, %187 : vector<16x64xf32>
    %189 = arith.truncf %188 : vector<16x64xf32> to vector<16x64xbf16>
    %c0_67 = arith.constant 0 : index
    %c0_68 = arith.constant 0 : index
    %190 = vector.load %arg12[%c0_67, %c0_68] : memref<64x32xbf16, #tpu.memory_space<vmem>>, vector<64x32xbf16>
    %cst_69 = arith.constant dense<0.000000e+00> : vector<16x32xf32>
    %191 = tpu.matmul %189, %190, %cst_69 {dimension_numbers = #tpu.dot_dimension_numbers<[1], [0], [0], [1], [0, 0, 1, 1], [], []>} : vector<16x64xbf16>, vector<64x32xbf16>, vector<16x32xf32> -> vector<16x32xf32>
    %192 = vector.broadcast %8 : vector<1x32xf32> to vector<16x32xf32>
    %193 = arith.addf %191, %192 : vector<16x32xf32>
    %194 = arith.addf %193, %159 : vector<16x32xf32>
    %c0_70 = arith.constant 0 : index
    %c0_71 = arith.constant 0 : index
    %195 = vector.load %arg14[%c0_70, %c0_71] : memref<16x32xf32, #tpu.memory_space<vmem>>, vector<16x32xf32>
    tpu.vector_store %arg14[%c0_70, %c0_71], %194 {strides = array<i32>} : memref<16x32xf32, #tpu.memory_space<vmem>>, vector<16x32xf32>,
    return
  }
  func.func @transform_0(%arg0: i32) -> (i32, i32) {
    %c0_i32 = arith.constant 0 : i32
    %c0_i32_0 = arith.constant 0 : i32
    %c0_i32_1 = arith.constant 0 : i32
    return %c0_i32, %c0_i32_0 : i32, i32
  }
  func.func @transform_1(%arg0: i32) -> (i32, i32) {
    %c0_i32 = arith.constant 0 : i32
    %c0_i32_0 = arith.constant 0 : i32
    %c0_i32_1 = arith.constant 0 : i32
    return %c0_i32, %c0_i32_0 : i32, i32
  }
  func.func @transform_2(%arg0: i32) -> (i32, i32) {
    %c0_i32 = arith.constant 0 : i32
    %c0_i32_0 = arith.constant 0 : i32
    %c0_i32_1 = arith.constant 0 : i32
    return %c0_i32, %c0_i32_0 : i32, i32
  }
  func.func @transform_3(%arg0: i32) -> (i32, i32) {
    %c0_i32 = arith.constant 0 : i32
    %c0_i32_0 = arith.constant 0 : i32
    %c0_i32_1 = arith.constant 0 : i32
    return %c0_i32, %c0_i32_0 : i32, i32
  }
  func.func @transform_4(%arg0: i32) -> (i32, i32) {
    %c0_i32 = arith.constant 0 : i32
    %c0_i32_0 = arith.constant 0 : i32
    %c0_i32_1 = arith.constant 0 : i32
    return %c0_i32, %c0_i32_0 : i32, i32
  }
  func.func @transform_5(%arg0: i32) -> (i32, i32, i32) {
    %c0_i32 = arith.constant 0 : i32
    %c0_i32_0 = arith.constant 0 : i32
    %c0_i32_1 = arith.constant 0 : i32
    %c0_i32_2 = arith.constant 0 : i32
    return %c0_i32, %c0_i32_0, %c0_i32_1 : i32, i32, i32
  }
  func.func @transform_6(%arg0: i32) -> (i32, i32) {
    %c0_i32 = arith.constant 0 : i32
    %c0_i32_0 = arith.constant 0 : i32
    %c0_i32_1 = arith.constant 0 : i32
    return %c0_i32, %c0_i32_0 : i32, i32
  }
  func.func @transform_7(%arg0: i32) -> (i32, i32) {
    %c0_i32 = arith.constant 0 : i32
    %c0_i32_0 = arith.constant 0 : i32
    %c0_i32_1 = arith.constant 0 : i32
    return %c0_i32, %c0_i32_0 : i32, i32
  }
  func.func @transform_8(%arg0: i32) -> (i32, i32) {
    %c0_i32 = arith.constant 0 : i32
    %c0_i32_0 = arith.constant 0 : i32
    %c0_i32_1 = arith.constant 0 : i32
    return %c0_i32, %c0_i32_0 : i32, i32
  }
  func.func @transform_9(%arg0: i32) -> (i32, i32) {
    %c0_i32 = arith.constant 0 : i32
    %c0_i32_0 = arith.constant 0 : i32
    %c0_i32_1 = arith.constant 0 : i32
    return %c0_i32, %c0_i32_0 : i32, i32
  }
  func.func @transform_10(%arg0: i32) -> (i32, i32) {
    %c0_i32 = arith.constant 0 : i32
    %c0_i32_0 = arith.constant 0 : i32
    %c0_i32_1 = arith.constant 0 : i32
    return %c0_i32, %c0_i32_0 : i32, i32
  }
  func.func @transform_11(%arg0: i32) -> (i32, i32) {
    %c0_i32 = arith.constant 0 : i32
    %c0_i32_0 = arith.constant 0 : i32
    %c0_i32_1 = arith.constant 0 : i32
    return %c0_i32, %c0_i32_0 : i32, i32
  }
  func.func @transform_12(%arg0: i32) -> (i32, i32) {
    %c0_i32 = arith.constant 0 : i32
    %c0_i32_0 = arith.constant 0 : i32
    %c0_i32_1 = arith.constant 0 : i32
    return %c0_i32, %c0_i32_0 : i32, i32
  }
  func.func @transform_13(%arg0: i32) -> (i32, i32) {
    %c0_i32 = arith.constant 0 : i32
    %c0_i32_0 = arith.constant 0 : i32
    %c0_i32_1 = arith.constant 0 : i32
    return %c0_i32, %c0_i32_0 : i32, i32
  }
}

</mosaic_0001>

<llo_original>
// kernel: tpu_custom_call.1
$region0: #{tpu_custom_call.1}
  #allocation0 [shape = 'u32[]', space=smem, size = 0x4, offset = 0x4, fixed_abs, tag = 'smem constant byte address 0x4 - core index']
  #allocation1 [shape = 'u32[144,128]{1,0:T(1,128)}', space=vmem, size = 0x12000, scoped, tag = 'internal scratch']
  %s0 = inlined_call_operand.hbm [shape: f32[16,32], index: 0, kind: input, shape index: {}]
  %s1 = inlined_call_operand.vmem [shape: f32[1,32], index: 1, kind: input, shape index: {}]
  %s2 = inlined_call_operand.vmem [shape: f32[1,32], index: 2, kind: input, shape index: {}]
  %s3 = inlined_call_operand.hbm [shape: bf16[32,384], index: 3, kind: input, shape index: {}]
  %s4 = inlined_call_operand.hbm [shape: f32[1,384], index: 4, kind: input, shape index: {}]
  %s5 = inlined_call_operand.vmem [shape: bf16[4,32,32], index: 5, kind: input, shape index: {}]
  %s6 = inlined_call_operand.hbm [shape: f32[1,32], index: 6, kind: input, shape index: {}]
  %s7 = inlined_call_operand.hbm [shape: f32[1,32], index: 7, kind: input, shape index: {}]
  %s8 = inlined_call_operand.hbm [shape: f32[1,32], index: 8, kind: input, shape index: {}]
  %s9 = inlined_call_operand.hbm [shape: bf16[32,64], index: 9, kind: input, shape index: {}]
  %s10 = inlined_call_operand.vmem [shape: f32[1,64], index: 10, kind: input, shape index: {}]
  %s11 = inlined_call_operand.vmem [shape: bf16[64,32], index: 11, kind: input, shape index: {}]
  %s12 = inlined_call_operand.vmem [shape: f32[1,32], index: 12, kind: input, shape index: {}]
  %s13 = inlined_call_operand.hbm [shape: f32[16,32], index: 13, kind: output, shape index: {}]
  %s14 = sld [smem:[#allocation0]]
  $region90: #{tpu_custom_call.1} parent=0
    _
  %s16 = ssub.s32 1, %s14
  %s17 = scalar_select 0, %s16, %s14
  $region1: #{tpu_custom_call.1} parent=0
    #allocation2 [shape = 'u8[8192]{0}', space=vmem, size = 0x2000, scoped, tag = 'input window, operand 0, single buffered']
    #allocation3 [shape = 's32[1]{0}', space=sflag, size = 0x4, scoped, tag = 'scoped memory for tpu_custom_call.1']
    #allocation4 [shape = 's32[1]{0}', space=sflag, size = 0x4, scoped, tag = 'scoped memory for tpu_custom_call.1']
    #allocation5 [shape = 'u8[24576]{0}', space=vmem, size = 0x6000, scoped, tag = 'input window, operand 3, single buffered']
    #allocation6 [shape = 's32[1]{0}', space=sflag, size = 0x4, scoped, tag = 'scoped memory for tpu_custom_call.1']
    #allocation7 [shape = 'u8[1536]{0}', space=vmem, size = 0x800, scoped, tag = 'input window, operand 4, single buffered']
    #allocation8 [shape = 'u8[512]{0}', space=vmem, size = 0x400, scoped, tag = 'input window, operand 6, single buffered']
    #allocation9 [shape = 's32[1]{0}', space=sflag, size = 0x4, scoped, tag = 'scoped memory for tpu_custom_call.1']
    #allocation10 [shape = 'u8[512]{0}', space=vmem, size = 0x400, scoped, tag = 'input window, operand 7, single buffered']
    #allocation11 [shape = 'u8[512]{0}', space=vmem, size = 0x400, scoped, tag = 'input window, operand 8, single buffered']
    #allocation12 [shape = 's32[1]{0}', space=sflag, size = 0x4, scoped, tag = 'scoped memory for tpu_custom_call.1']
    #allocation13 [shape = 'u8[8192]{0}', space=vmem, size = 0x2000, scoped, tag = 'input window, operand 9, single buffered']
    #allocation14 [shape = 'u8[8192]{0}', space=vmem, size = 0x2000, scoped, tag = 'output window, operand 0, single buffered']
    %18 = vsyncpa [#allocation3], 0
    %19 = vsyncpa [#allocation6], 0
    %20 = vsyncpa [#allocation9], 0
    %21 = vsyncpa [#allocation12], 0
    %22 = vsyncpa [#allocation4], 0
    // Predicated region
    $region2: #{tpu_custom_call.1} parent=1 // pred_check
      _
    $region3: #{tpu_custom_call.1} parent=1 // pred_check_branch
      %24 = sbr.rel (0) target = $region5
    $region4: #{tpu_custom_call.1} parent=1 // pred_region
      %s26 = ssub.s32 256, 256
      %27 = vsyncadd [#allocation3], %s26
      %s28 = sshll.u32 [#allocation2], 4
      %s29 = int_to_ptr.vmem [resolvable:$true] %s28
      %34 = dma.hbm_to_vmem [thread:$0]  %s0, 256, %s29, [#allocation3], 128, 128, 8
    $region5: #{tpu_custom_call.1} parent=1 // pred_fallthru
      _
    // Predicated region
    $region6: #{tpu_custom_call.1} parent=1 // pred_check
      _
    $region7: #{tpu_custom_call.1} parent=1 // pred_check_branch
      %36 = sbr.rel (0) target = $region9
    $region8: #{tpu_custom_call.1} parent=1 // pred_region
      _
    $region9: #{tpu_custom_call.1} parent=1 // pred_fallthru
      _
    // Predicated region
    $region10: #{tpu_custom_call.1} parent=1 // pred_check
      _
    $region11: #{tpu_custom_call.1} parent=1 // pred_check_branch
      %38 = sbr.rel (0) target = $region13
    $region12: #{tpu_custom_call.1} parent=1 // pred_region
      _
    $region13: #{tpu_custom_call.1} parent=1 // pred_fallthru
      _
    // Predicated region
    $region14: #{tpu_custom_call.1} parent=1 // pred_check
      _
    $region15: #{tpu_custom_call.1} parent=1 // pred_check_branch
      %40 = sbr.rel (0) target = $region17
    $region16: #{tpu_custom_call.1} parent=1 // pred_region
      %s42 = ssub.s32 768, 768
      %43 = vsyncadd [#allocation6], %s42
      %s44 = sshll.u32 [#allocation5], 4
      %s45 = int_to_ptr.vmem [resolvable:$true] %s44
      %50 = dma.hbm_to_vmem [thread:$0]  %s3, 768, %s45, [#allocation6], 192, 192, 12
    $region17: #{tpu_custom_call.1} parent=1 // pred_fallthru
      _
    // Predicated region
    $region18: #{tpu_custom_call.1} parent=1 // pred_check
      _
    $region19: #{tpu_custom_call.1} parent=1 // pred_check_branch
      %52 = sbr.rel (0) target = $region21
    $region20: #{tpu_custom_call.1} parent=1 // pred_region
      %s54 = ssub.s32 48, 48
      %55 = vsyncadd [#allocation6], %s54
      %s57 = sshll.u32 [#allocation7], 4
      %s58 = int_to_ptr.vmem [resolvable:$true] %s57
      %60 = dma.hbm_to_vmem [thread:$0]  %s4, 48, %s58, [#allocation6]
    $region21: #{tpu_custom_call.1} parent=1 // pred_fallthru
      _
    // Predicated region
    $region22: #{tpu_custom_call.1} parent=1 // pred_check
      _
    $region23: #{tpu_custom_call.1} parent=1 // pred_check_branch
      %62 = sbr.rel (0) target = $region25
    $region24: #{tpu_custom_call.1} parent=1 // pred_region
      _
    $region25: #{tpu_custom_call.1} parent=1 // pred_fallthru
      _
    // Predicated region
    $region26: #{tpu_custom_call.1} parent=1 // pred_check
      _
    $region27: #{tpu_custom_call.1} parent=1 // pred_check_branch
      %64 = sbr.rel (0) target = $region29
    $region28: #{tpu_custom_call.1} parent=1 // pred_region
      %s66 = ssub.s32 16, 16
      %67 = vsyncadd [#allocation9], %s66
      %s69 = sshll.u32 [#allocation8], 4
      %s70 = int_to_ptr.vmem [resolvable:$true] %s69
      %72 = dma.hbm_to_vmem [thread:$0]  %s6, 16, %s70, [#allocation9]
    $region29: #{tpu_custom_call.1} parent=1 // pred_fallthru
      _
    // Predicated region
    $region30: #{tpu_custom_call.1} parent=1 // pred_check
      _
    $region31: #{tpu_custom_call.1} parent=1 // pred_check_branch
      %74 = sbr.rel (0) target = $region33
    $region32: #{tpu_custom_call.1} parent=1 // pred_region
      %s76 = ssub.s32 16, 16
      %77 = vsyncadd [#allocation9], %s76
      %s79 = sshll.u32 [#allocation10], 4
      %s80 = int_to_ptr.vmem [resolvable:$true] %s79
      %82 = dma.hbm_to_vmem [thread:$0]  %s7, 16, %s80, [#allocation9]
    $region33: #{tpu_custom_call.1} parent=1 // pred_fallthru
      _
    // Predicated region
    $region34: #{tpu_custom_call.1} parent=1 // pred_check
      _
    $region35: #{tpu_custom_call.1} parent=1 // pred_check_branch
      %84 = sbr.rel (0) target = $region37
    $region36: #{tpu_custom_call.1} parent=1 // pred_region
      %s86 = ssub.s32 16, 16
      %87 = vsyncadd [#allocation12], %s86
      %s89 = sshll.u32 [#allocation11], 4
      %s90 = int_to_ptr.vmem [resolvable:$true] %s89
      %92 = dma.hbm_to_vmem [thread:$0]  %s8, 16, %s90, [#allocation12]
    $region37: #{tpu_custom_call.1} parent=1 // pred_fallthru
      _
    // Predicated region
    $region38: #{tpu_custom_call.1} parent=1 // pred_check
      _
    $region39: #{tpu_custom_call.1} parent=1 // pred_check_branch
      %94 = sbr.rel (0) target = $region41
    $region40: #{tpu_custom_call.1} parent=1 // pred_region
      %s96 = ssub.s32 256, 256
      %97 = vsyncadd [#allocation12], %s96
      %s98 = sshll.u32 [#allocation13], 4
      %s99 = int_to_ptr.vmem [resolvable:$true] %s98
      %104 = dma.hbm_to_vmem [thread:$0]  %s9, 256, %s99, [#allocation12], 64, 64, 4
    $region41: #{tpu_custom_call.1} parent=1 // pred_fallthru
      _
    // Predicated region
    $region42: #{tpu_custom_call.1} parent=1 // pred_check
      _
    $region43: #{tpu_custom_call.1} parent=1 // pred_check_branch
      %106 = sbr.rel (0) target = $region45
    $region44: #{tpu_custom_call.1} parent=1 // pred_region
      _
    $region45: #{tpu_custom_call.1} parent=1 // pred_fallthru
      _
    // Predicated region
    $region46: #{tpu_custom_call.1} parent=1 // pred_check
      _
    $region47: #{tpu_custom_call.1} parent=1 // pred_check_branch
      %108 = sbr.rel (0) target = $region49
    $region48: #{tpu_custom_call.1} parent=1 // pred_region
      _
    $region49: #{tpu_custom_call.1} parent=1 // pred_fallthru
      _
    // Predicated region
    $region50: #{tpu_custom_call.1} parent=1 // pred_check
      _
    $region51: #{tpu_custom_call.1} parent=1 // pred_check_branch
      %110 = sbr.rel (0) target = $region53
    $region52: #{tpu_custom_call.1} parent=1 // pred_region
      _
    $region53: #{tpu_custom_call.1} parent=1 // pred_fallthru
      _
    // Predicated region
    $region54: #{tpu_custom_call.1} parent=1 // pred_check
      _
    $region55: #{tpu_custom_call.1} parent=1 // pred_check_branch
      %112 = sbr.rel (0) target = $region57
    $region56: #{tpu_custom_call.1} parent=1 // pred_region
      %113 = dma.done [#allocation3], 256
    $region57: #{tpu_custom_call.1} parent=1 // pred_fallthru
      _
    // Predicated region
    $region58: #{tpu_custom_call.1} parent=1 // pred_check
      _
    $region59: #{tpu_custom_call.1} parent=1 // pred_check_branch
      %115 = sbr.rel (0) target = $region61
    $region60: #{tpu_custom_call.1} parent=1 // pred_region
      %116 = dma.done [#allocation6], 768
    $region61: #{tpu_custom_call.1} parent=1 // pred_fallthru
      _
    // Predicated region
    $region62: #{tpu_custom_call.1} parent=1 // pred_check
      _
    $region63: #{tpu_custom_call.1} parent=1 // pred_check_branch
      %118 = sbr.rel (0) target = $region65
    $region64: #{tpu_custom_call.1} parent=1 // pred_region
      %119 = dma.done [#allocation6], 48
    $region65: #{tpu_custom_call.1} parent=1 // pred_fallthru
      _
    // Predicated region
    $region66: #{tpu_custom_call.1} parent=1 // pred_check
      _
    $region67: #{tpu_custom_call.1} parent=1 // pred_check_branch
      %121 = sbr.rel (0) target = $region69
    $region68: #{tpu_custom_call.1} parent=1 // pred_region
      %122 = dma.done [#allocation9], 16
    $region69: #{tpu_custom_call.1} parent=1 // pred_fallthru
      _
    // Predicated region
    $region70: #{tpu_custom_call.1} parent=1 // pred_check
      _
    $region71: #{tpu_custom_call.1} parent=1 // pred_check_branch
      %124 = sbr.rel (0) target = $region73
    $region72: #{tpu_custom_call.1} parent=1 // pred_region
      %125 = dma.done [#allocation9], 16
    $region73: #{tpu_custom_call.1} parent=1 // pred_fallthru
      _
    // Predicated region
    $region74: #{tpu_custom_call.1} parent=1 // pred_check
      _
    $region75: #{tpu_custom_call.1} parent=1 // pred_check_branch
      %127 = sbr.rel (0) target = $region77
    $region76: #{tpu_custom_call.1} parent=1 // pred_region
      %128 = dma.done [#allocation12], 16
    $region77: #{tpu_custom_call.1} parent=1 // pred_fallthru
      _
    // Predicated region
    $region78: #{tpu_custom_call.1} parent=1 // pred_check
      _
    $region79: #{tpu_custom_call.1} parent=1 // pred_check_branch
      %130 = sbr.rel (0) target = $region81
    $region80: #{tpu_custom_call.1} parent=1 // pred_region
      %131 = dma.done [#allocation12], 256
    $region81: #{tpu_custom_call.1} parent=1 // pred_fallthru
      _
    %v133 = vld [vmem:[#allocation2] sm:$0xff]
    %v134 = vld [vmem:[#allocation2 + $0x8] sm:$0xff]
    %v135 = vld [vmem:[%s1] sm:$0x1]
    %v136 = vld [vmem:[%s2] sm:$0x1]
    %v137 = vld [vmem:[#allocation10] sm:$0x1]
    %v138 = vld [vmem:[#allocation11] sm:$0x1]
    %v139 = vld [vmem:[#allocation7] sm:$0x7]
    %v140 = vld [vmem:[#allocation8] sm:$0x1]
    %v141 = vld [vmem:[%s10] sm:$0x1]
    %v142 = vld [vmem:[%s12] sm:$0x1]
    %vm143 = vcmask 261120
    %v144 = vsel %vm143, %v133, 0.0
    %145 = vadd.xlane.f32.xlu0 %v144
    %v146 = vpop.xlane.xlu0 %145
    %v147 = vsel %vm143, %v134, 0.0
    %148 = vadd.xlane.f32.xlu0 %v147
    %v149 = vpop.xlane.xlu0 %148
    %v150 = vrcp.pop 32.0
    %v151 = vmul.f32 %v146, %v150
    %v152 = vmul.f32 %v149, %v150
    %v153 = vsub.f32 %v133, %v151
    %v154 = vsub.f32 %v134, %v152
    %v155 = vmul.f32 %v153, %v153
    %v156 = vmul.f32 %v154, %v154
    %v157 = vsel %vm143, %v155, 0.0
    %158 = vadd.xlane.f32.xlu0 %v157
    %v159 = vpop.xlane.xlu0 %158
    %v160 = vsel %vm143, %v156, 0.0
    %161 = vadd.xlane.f32.xlu0 %v160
    %v162 = vpop.xlane.xlu0 %161
    %v163 = vmul.f32 %v159, %v150
    %v164 = vmul.f32 %v162, %v150
    %v165 = vadd.f32 %v163, 1e-05
    %v166 = vadd.f32 %v164, 1e-05
    %v167 = vrsqrt.pop %v165
    %v168 = vrsqrt.pop %v166
    %v169 = vmul.f32 %v153, %v167
    %v170 = vmul.f32 %v154, %v168
    %v172 = vlaneseq
    %v173 = vshrl.u32 %v172, 7
    %v174 = vsub.s32 0, %v173
    %v175 = vrot.slane %v135, %v174
    %v177 = vmul.f32 %v169, %v175
    %v178 = vmul.f32 %v170, %v175
    %v180 = vlaneseq
    %v181 = vshrl.u32 %v180, 7
    %v182 = vsub.s32 0, %v181
    %v183 = vrot.slane %v136, %v182
    %v185 = vadd.f32 %v177, %v183
    %v186 = vadd.f32 %v178, %v183
    %v187 = vpack.c.bf16 %v186, %v185
    %v188 = vld [vmem:[#allocation5] sm:$0xff]
    %v189 = vld [vmem:[#allocation5 + $0x8] sm:$0xf]
    %v190 = vld [vmem:[#allocation5 + $0xc] sm:$0xff]
    %v191 = vld [vmem:[#allocation5 + $0x14] sm:$0xf]
    %v192 = vld [vmem:[#allocation5 + $0x18] sm:$0xff]
    %v193 = vld [vmem:[#allocation5 + $0x20] sm:$0xf]
    %v194 = vld [vmem:[#allocation5 + $0x24] sm:$0xff]
    %v195 = vld [vmem:[#allocation5 + $0x2c] sm:$0xf]
    %v197 = vlaneseq
    %v198 = vshrl.u32 %v197, 7
    %v199 = vsub.s32 0, %v198
    %v200 = vrot.slane %v139, %v199
    %v201 = vlaneseq
    %v202 = vshrl.u32 %v201, 7
    %v203 = vsub.s32 1, %v202
    %v204 = vrot.slane %v139, %v203
    %v205 = vlaneseq
    %v206 = vshrl.u32 %v205, 7
    %v207 = vsub.s32 2, %v206
    %v208 = vrot.slane %v139, %v207
    %v220 = vunpack.c.l.b16 %v188
    %v221 = vunpack.c.h.b16 %v188
    %v222 = vunpack.c.l.b16 %v189
    %v223 = vunpack.c.l.b16 %v190
    %v224 = vunpack.c.h.b16 %v190
    %v225 = vunpack.c.l.b16 %v191
    %v226 = vunpack.c.l.b16 %v192
    %v227 = vunpack.c.h.b16 %v192
    %v228 = vunpack.c.l.b16 %v193
    %v229 = vunpack.c.l.b16 %v194
    %v230 = vunpack.c.h.b16 %v194
    %v231 = vunpack.c.l.b16 %v195
    %v232 = vpack.c.b16 %v223, %v220
    %v233 = vpack.c.b16 %v224, %v221
    %v234 = vpack.c.b16 %v225, %v222
    %v235 = vpack.c.b16 %v229, %v226
    %v236 = vpack.c.b16 %v230, %v227
    %v237 = vpack.c.b16 %v231, %v228
    %v245 = vsel %vm143, %v187, 0
    %247 = vmatprep.subr.bf16.mxu0 %v233
    %248 = vmatpush1.bf16.msra.mxu0 %v232
    %249 = vmatprep.subr.bf16.mxu0 %v236
    %250 = vmatpush1.bf16.msra.mxu0 %v235
    %251 = vmatprep.subr.bf16.mxu0 0
    %252 = vmatpush1.bf16.msra.mxu0 0
    %253 = vmatprep.subr.bf16.mxu0 0
    %254 = vmatpush1.bf16.msra.mxu0 0
    %255 = vmatprep.subr.bf16.mxu0 0
    %256 = vmatpush1.bf16.msra.mxu0 0
    %257 = vmatprep.subr.bf16.mxu0 0
    %258 = vmatpush1.bf16.msra.mxu0 0
    %259 = vmatprep.subr.bf16.mxu0 0
    %260 = vmatpush1.bf16.msra.mxu0 0
    %261 = vmatprep.subr.bf16.mxu0 0
    %262 = vmatpush1.bf16.msra.mxu0 0
    %263 = vmatprep.subr.bf16.mxu0 0
    %264 = vmatpush1.bf16.msra.mxu0 0
    %265 = vmatprep.subr.bf16.mxu0 0
    %266 = vmatpush1.bf16.msra.mxu0 0
    %267 = vmatprep.subr.bf16.mxu0 0
    %268 = vmatpush1.bf16.msra.mxu0 0
    %269 = vmatprep.subr.bf16.mxu0 0
    %270 = vmatpush1.bf16.msra.mxu0 0
    %271 = vmatprep.subr.bf16.mxu0 0
    %272 = vmatpush1.bf16.msra.mxu0 0
    %273 = vmatprep.subr.bf16.mxu0 0
    %274 = vmatpush1.bf16.msra.mxu0 0
    %275 = vmatprep.subr.bf16.mxu0 0
    %276 = vmatpush1.bf16.msra.mxu0 0
    %277 = vmatprep.subr.bf16.mxu0 0
    %278 = vmatpush1.bf16.msra.mxu0 0
    %279 = vmatprep.mubr.bf16.mxu0 0
    %280 = vmatmul.mubr.bf16.gmra.mrb[0].mxu0 %v245
    %v281 = vpop.f32.mrb[0].mxu0
    %v282 = vadd.f32 %v200, %v281
    %v283 = vpop.f32.mrb[0].mxu0
    %v284 = vadd.f32 %v204, %v283
    %v285 = vpop.f32.mrb[0].mxu0
    %v286 = vadd.f32 %v200, %v285
    %v287 = vpop.f32.mrb[0].mxu0
    %v288 = vadd.f32 %v204, %v287
    %289 = vdwg.mxu0
    %290 = vmatprep.subr.bf16.mxu0 0
    %291 = vmatpush1.bf16.msra.mxu0 %v234
    %292 = vmatprep.subr.bf16.mxu0 0
    %293 = vmatpush1.bf16.msra.mxu0 %v237
    %294 = vmatprep.subr.bf16.mxu0 0
    %295 = vmatpush1.bf16.msra.mxu0 0
    %296 = vmatprep.subr.bf16.mxu0 0
    %297 = vmatpush1.bf16.msra.mxu0 0
    %298 = vmatprep.subr.bf16.mxu0 0
    %299 = vmatpush1.bf16.msra.mxu0 0
    %300 = vmatprep.subr.bf16.mxu0 0
    %301 = vmatpush1.bf16.msra.mxu0 0
    %302 = vmatprep.subr.bf16.mxu0 0
    %303 = vmatpush1.bf16.msra.mxu0 0
    %304 = vmatprep.subr.bf16.mxu0 0
    %305 = vmatpush1.bf16.msra.mxu0 0
    %306 = vmatprep.subr.bf16.mxu0 0
    %307 = vmatpush1.bf16.msra.mxu0 0
    %308 = vmatprep.subr.bf16.mxu0 0
    %309 = vmatpush1.bf16.msra.mxu0 0
    %310 = vmatprep.subr.bf16.mxu0 0
    %311 = vmatpush1.bf16.msra.mxu0 0
    %312 = vmatprep.subr.bf16.mxu0 0
    %313 = vmatpush1.bf16.msra.mxu0 0
    %314 = vmatprep.subr.bf16.mxu0 0
    %315 = vmatpush1.bf16.msra.mxu0 0
    %316 = vmatprep.subr.bf16.mxu0 0
    %317 = vmatpush1.bf16.msra.mxu0 0
    %318 = vmatprep.subr.bf16.mxu0 0
    %319 = vmatpush1.bf16.msra.mxu0 0
    %320 = vmatprep.subr.bf16.mxu0 0
    %321 = vmatpush1.bf16.msra.mxu0 0
    %322 = vmatprep.mubr.bf16.mxu0 0
    %323 = vmatmul.mubr.bf16.gmra.mrb[0].mxu0 %v245
    %v324 = vpop.f32.mrb[0].mxu0
    %v325 = vadd.f32 %v208, %v324
    %v326 = vpop.f32.mrb[0].mxu0
    %v327 = vpop.f32.mrb[0].mxu0
    %v328 = vadd.f32 %v208, %v327
    %v329 = vpop.f32.mrb[0].mxu0
    %330 = vdwg.mxu0
    %v331 = vpack.c.bf16 %v282, %v282
    %v332 = vpack.c.bf16 %v286, %v286
    %v333 = vpack.c.bf16 %v284, %v284
    %v334 = vpack.c.bf16 %v288, %v288
    %v335 = vpack.c.bf16 %v325, %v325
    %v336 = vpack.c.bf16 %v328, %v328
    %v338 = vsel %vm143, %v331, 0
    %v341 = vsel %vm143, %v333, 0
    %343 = vmatprep.subr.bf16.mxu0 0
    %344 = vmatpush1.bf16.xpose.msra.mxu0 %v341
    %345 = vmatprep.subr.bf16.mxu0 0
    %346 = vmatpush1.bf16.xpose.msra.mxu0 0
    %347 = vmatprep.subr.bf16.mxu0 0
    %348 = vmatpush1.bf16.xpose.msra.mxu0 0
    %349 = vmatprep.subr.bf16.mxu0 0
    %350 = vmatpush1.bf16.xpose.msra.mxu0 0
    %351 = vmatprep.subr.bf16.mxu0 0
    %352 = vmatpush1.bf16.xpose.msra.mxu0 0
    %353 = vmatprep.subr.bf16.mxu0 0
    %354 = vmatpush1.bf16.xpose.msra.mxu0 0
    %355 = vmatprep.subr.bf16.mxu0 0
    %356 = vmatpush1.bf16.xpose.msra.mxu0 0
    %357 = vmatprep.subr.bf16.mxu0 0
    %358 = vmatpush1.bf16.xpose.msra.mxu0 0
    %359 = vmatprep.subr.bf16.mxu0 0
    %360 = vmatpush1.bf16.xpose.msra.mxu0 0
    %361 = vmatprep.subr.bf16.mxu0 0
    %362 = vmatpush1.bf16.xpose.msra.mxu0 0
    %363 = vmatprep.subr.bf16.mxu0 0
    %364 = vmatpush1.bf16.xpose.msra.mxu0 0
    %365 = vmatprep.subr.bf16.mxu0 0
    %366 = vmatpush1.bf16.xpose.msra.mxu0 0
    %367 = vmatprep.subr.bf16.mxu0 0
    %368 = vmatpush1.bf16.xpose.msra.mxu0 0
    %369 = vmatprep.subr.bf16.mxu0 0
    %370 = vmatpush1.bf16.xpose.msra.mxu0 0
    %371 = vmatprep.subr.bf16.mxu0 0
    %372 = vmatpush1.bf16.xpose.msra.mxu0 0
    %373 = vmatprep.subr.bf16.mxu0 0
    %374 = vmatpush1.bf16.xpose.msra.mxu0 0
    %375 = vmatprep.mubr.bf16.mxu0 0
    %376 = vmatmul.mubr.bf16.gmra.mrb[0].mxu0 %v338
    %v377 = vpop.f32.mrb[0].mxu0
    %v378 = vadd.f32 0.0, %v377
    %v379 = vpop.f32.mrb[0].mxu0
    %v380 = vpop.f32.mrb[0].mxu0
    %v381 = vpop.f32.mrb[0].mxu0
    %382 = vdwg.mxu0
    %v384 = vsel %vm143, %v332, 0
    %v387 = vsel %vm143, %v334, 0
    %389 = vmatprep.subr.bf16.mxu0 0
    %390 = vmatpush1.bf16.xpose.msra.mxu0 %v387
    %391 = vmatprep.subr.bf16.mxu0 0
    %392 = vmatpush1.bf16.xpose.msra.mxu0 0
    %393 = vmatprep.subr.bf16.mxu0 0
    %394 = vmatpush1.bf16.xpose.msra.mxu0 0
    %395 = vmatprep.subr.bf16.mxu0 0
    %396 = vmatpush1.bf16.xpose.msra.mxu0 0
    %397 = vmatprep.subr.bf16.mxu0 0
    %398 = vmatpush1.bf16.xpose.msra.mxu0 0
    %399 = vmatprep.subr.bf16.mxu0 0
    %400 = vmatpush1.bf16.xpose.msra.mxu0 0
    %401 = vmatprep.subr.bf16.mxu0 0
    %402 = vmatpush1.bf16.xpose.msra.mxu0 0
    %403 = vmatprep.subr.bf16.mxu0 0
    %404 = vmatpush1.bf16.xpose.msra.mxu0 0
    %405 = vmatprep.subr.bf16.mxu0 0
    %406 = vmatpush1.bf16.xpose.msra.mxu0 0
    %407 = vmatprep.subr.bf16.mxu0 0
    %408 = vmatpush1.bf16.xpose.msra.mxu0 0
    %409 = vmatprep.subr.bf16.mxu0 0
    %410 = vmatpush1.bf16.xpose.msra.mxu0 0
    %411 = vmatprep.subr.bf16.mxu0 0
    %412 = vmatpush1.bf16.xpose.msra.mxu0 0
    %413 = vmatprep.subr.bf16.mxu0 0
    %414 = vmatpush1.bf16.xpose.msra.mxu0 0
    %415 = vmatprep.subr.bf16.mxu0 0
    %416 = vmatpush1.bf16.xpose.msra.mxu0 0
    %417 = vmatprep.subr.bf16.mxu0 0
    %418 = vmatpush1.bf16.xpose.msra.mxu0 0
    %419 = vmatprep.subr.bf16.mxu0 0
    %420 = vmatpush1.bf16.xpose.msra.mxu0 0
    %421 = vmatprep.mubr.bf16.mxu0 0
    %422 = vmatmul.mubr.bf16.gmra.mrb[0].mxu0 %v384
    %v423 = vpop.f32.mrb[0].mxu0
    %v424 = vadd.f32 0.0, %v423
    %v425 = vpop.f32.mrb[0].mxu0
    %v426 = vpop.f32.mrb[0].mxu0
    %v427 = vpop.f32.mrb[0].mxu0
    %428 = vdwg.mxu0
    %v429 = vmul.f32 %v378, 0.17677669
    %v430 = vmul.f32 %v424, 0.17677669
    %vm431 = vcmask 64512
    %v432 = vsel %vm431, %v429, -inf
    %433 = vmax.xlane.f32.xlu0 %v432
    %v434 = vpop.xlane.xlu0 %433
    %v435 = vsel %vm431, %v430, -inf
    %436 = vmax.xlane.f32.xlu0 %v435
    %v437 = vpop.xlane.xlu0 %436
    %v438 = vsub.f32 %v429, %v434
    %v439 = vsub.f32 %v430, %v437
    %v440 = vmul.f32 %v438, 1.442695
    %v441 = vpow.pop %v440
    %v442 = vmul.f32 %v439, 1.442695
    %v443 = vpow.pop %v442
    %v444 = vsel %vm431, %v441, 0.0
    %445 = vadd.xlane.f32.xlu0 %v444
    %v446 = vpop.xlane.xlu0 %445
    %v447 = vsel %vm431, %v443, 0.0
    %448 = vadd.xlane.f32.xlu0 %v447
    %v449 = vpop.xlane.xlu0 %448
    %v450 = vrcp.pop %v446
    %v451 = vrcp.pop %v449
    %v452 = vmul.f32 %v441, %v450
    %v453 = vmul.f32 %v443, %v451
    %v454 = vpack.c.bf16 %v452, %v452
    %v455 = vpack.c.bf16 %v453, %v453
    %v457 = vsel %vm431, %v454, 0
    %vm459 = vcmask 1043456
    %v461 = vsel %vm459, %v335, 0
    %463 = vmatprep.subr.bf16.mxu0 0
    %464 = vmatpush1.bf16.msra.mxu0 %v461
    %465 = vmatprep.subr.bf16.mxu0 0
    %466 = vmatpush1.bf16.msra.mxu0 0
    %467 = vmatprep.subr.bf16.mxu0 0
    %468 = vmatpush1.bf16.msra.mxu0 0
    %469 = vmatprep.subr.bf16.mxu0 0
    %470 = vmatpush1.bf16.msra.mxu0 0
    %471 = vmatprep.subr.bf16.mxu0 0
    %472 = vmatpush1.bf16.msra.mxu0 0
    %473 = vmatprep.subr.bf16.mxu0 0
    %474 = vmatpush1.bf16.msra.mxu0 0
    %475 = vmatprep.subr.bf16.mxu0 0
    %476 = vmatpush1.bf16.msra.mxu0 0
    %477 = vmatprep.subr.bf16.mxu0 0
    %478 = vmatpush1.bf16.msra.mxu0 0
    %479 = vmatprep.subr.bf16.mxu0 0
    %480 = vmatpush1.bf16.msra.mxu0 0
    %481 = vmatprep.subr.bf16.mxu0 0
    %482 = vmatpush1.bf16.msra.mxu0 0
    %483 = vmatprep.subr.bf16.mxu0 0
    %484 = vmatpush1.bf16.msra.mxu0 0
    %485 = vmatprep.subr.bf16.mxu0 0
    %486 = vmatpush1.bf16.msra.mxu0 0
    %487 = vmatprep.subr.bf16.mxu0 0
    %488 = vmatpush1.bf16.msra.mxu0 0
    %489 = vmatprep.subr.bf16.mxu0 0
    %490 = vmatpush1.bf16.msra.mxu0 0
    %491 = vmatprep.subr.bf16.mxu0 0
    %492 = vmatpush1.bf16.msra.mxu0 0
    %493 = vmatprep.subr.bf16.mxu0 0
    %494 = vmatpush1.bf16.msra.mxu0 0
    %495 = vmatprep.mubr.bf16.mxu0 0
    %496 = vmatmul.mubr.bf16.gmra.mrb[0].mxu0 %v457
    %v497 = vpop.f32.mrb[0].mxu0
    %v498 = vadd.f32 0.0, %v497
    %v499 = vpop.f32.mrb[0].mxu0
    %v500 = vpop.f32.mrb[0].mxu0
    %v501 = vpop.f32.mrb[0].mxu0
    %502 = vdwg.mxu0
    %v504 = vsel %vm431, %v455, 0
    %v507 = vsel %vm459, %v336, 0
    %509 = vmatprep.subr.bf16.mxu0 0
    %510 = vmatpush1.bf16.msra.mxu0 %v507
    %511 = vmatprep.subr.bf16.mxu0 0
    %512 = vmatpush1.bf16.msra.mxu0 0
    %513 = vmatprep.subr.bf16.mxu0 0
    %514 = vmatpush1.bf16.msra.mxu0 0
    %515 = vmatprep.subr.bf16.mxu0 0
    %516 = vmatpush1.bf16.msra.mxu0 0
    %517 = vmatprep.subr.bf16.mxu0 0
    %518 = vmatpush1.bf16.msra.mxu0 0
    %519 = vmatprep.subr.bf16.mxu0 0
    %520 = vmatpush1.bf16.msra.mxu0 0
    %521 = vmatprep.subr.bf16.mxu0 0
    %522 = vmatpush1.bf16.msra.mxu0 0
    %523 = vmatprep.subr.bf16.mxu0 0
    %524 = vmatpush1.bf16.msra.mxu0 0
    %525 = vmatprep.subr.bf16.mxu0 0
    %526 = vmatpush1.bf16.msra.mxu0 0
    %527 = vmatprep.subr.bf16.mxu0 0
    %528 = vmatpush1.bf16.msra.mxu0 0
    %529 = vmatprep.subr.bf16.mxu0 0
    %530 = vmatpush1.bf16.msra.mxu0 0
    %531 = vmatprep.subr.bf16.mxu0 0
    %532 = vmatpush1.bf16.msra.mxu0 0
    %533 = vmatprep.subr.bf16.mxu0 0
    %534 = vmatpush1.bf16.msra.mxu0 0
    %535 = vmatprep.subr.bf16.mxu0 0
    %536 = vmatpush1.bf16.msra.mxu0 0
    %537 = vmatprep.subr.bf16.mxu0 0
    %538 = vmatpush1.bf16.msra.mxu0 0
    %539 = vmatprep.subr.bf16.mxu0 0
    %540 = vmatpush1.bf16.msra.mxu0 0
    %541 = vmatprep.mubr.bf16.mxu0 0
    %542 = vmatmul.mubr.bf16.gmra.mrb[0].mxu0 %v504
    %v543 = vpop.f32.mrb[0].mxu0
    %v544 = vadd.f32 0.0, %v543
    %v545 = vpop.f32.mrb[0].mxu0
    %v546 = vpop.f32.mrb[0].mxu0
    %v547 = vpop.f32.mrb[0].mxu0
    %548 = vdwg.mxu0
    %v549 = vpack.c.bf16 %v544, %v498
    %v550 = vld [vmem:[%s5] sm:$0xf]
    %v551 = vld [vmem:[%s5 + $0x4] sm:$0xf]
    %v552 = vld [vmem:[%s5 + $0x8] sm:$0xf]
    %v553 = vld [vmem:[%s5 + $0xc] sm:$0xf]
    %555 = vrot.lane.b32.xlu0 %v331, 96
    %v556 = vpop.permute.xlu0 %555
    %558 = vrot.lane.b32.xlu0 %v333, 96
    %v559 = vpop.permute.xlu0 %558
    %v561 = vsel %vm143, %v556, 0
    %v564 = vsel %vm143, %v559, 0
    %566 = vmatprep.subr.bf16.mxu0 0
    %567 = vmatpush1.bf16.xpose.msra.mxu0 %v564
    %568 = vmatprep.subr.bf16.mxu0 0
    %569 = vmatpush1.bf16.xpose.msra.mxu0 0
    %570 = vmatprep.subr.bf16.mxu0 0
    %571 = vmatpush1.bf16.xpose.msra.mxu0 0
    %572 = vmatprep.subr.bf16.mxu0 0
    %573 = vmatpush1.bf16.xpose.msra.mxu0 0
    %574 = vmatprep.subr.bf16.mxu0 0
    %575 = vmatpush1.bf16.xpose.msra.mxu0 0
    %576 = vmatprep.subr.bf16.mxu0 0
    %577 = vmatpush1.bf16.xpose.msra.mxu0 0
    %578 = vmatprep.subr.bf16.mxu0 0
    %579 = vmatpush1.bf16.xpose.msra.mxu0 0
    %580 = vmatprep.subr.bf16.mxu0 0
    %581 = vmatpush1.bf16.xpose.msra.mxu0 0
    %582 = vmatprep.subr.bf16.mxu0 0
    %583 = vmatpush1.bf16.xpose.msra.mxu0 0
    %584 = vmatprep.subr.bf16.mxu0 0
    %585 = vmatpush1.bf16.xpose.msra.mxu0 0
    %586 = vmatprep.subr.bf16.mxu0 0
    %587 = vmatpush1.bf16.xpose.msra.mxu0 0
    %588 = vmatprep.subr.bf16.mxu0 0
    %589 = vmatpush1.bf16.xpose.msra.mxu0 0
    %590 = vmatprep.subr.bf16.mxu0 0
    %591 = vmatpush1.bf16.xpose.msra.mxu0 0
    %592 = vmatprep.subr.bf16.mxu0 0
    %593 = vmatpush1.bf16.xpose.msra.mxu0 0
    %594 = vmatprep.subr.bf16.mxu0 0
    %595 = vmatpush1.bf16.xpose.msra.mxu0 0
    %596 = vmatprep.subr.bf16.mxu0 0
    %597 = vmatpush1.bf16.xpose.msra.mxu0 0
    %598 = vmatprep.mubr.bf16.mxu0 0
    %599 = vmatmul.mubr.bf16.gmra.mrb[0].mxu0 %v561
    %v600 = vpop.f32.mrb[0].mxu0
    %v601 = vadd.f32 0.0, %v600
    %v602 = vpop.f32.mrb[0].mxu0
    %v603 = vpop.f32.mrb[0].mxu0
    %v604 = vpop.f32.mrb[0].mxu0
    %605 = vdwg.mxu0
    %607 = vrot.lane.b32.xlu0 %v332, 96
    %v608 = vpop.permute.xlu0 %607
    %610 = vrot.lane.b32.xlu0 %v334, 96
    %v611 = vpop.permute.xlu0 %610
    %v613 = vsel %vm143, %v608, 0
    %v616 = vsel %vm143, %v611, 0
    %618 = vmatprep.subr.bf16.mxu0 0
    %619 = vmatpush1.bf16.xpose.msra.mxu0 %v616
    %620 = vmatprep.subr.bf16.mxu0 0
    %621 = vmatpush1.bf16.xpose.msra.mxu0 0
    %622 = vmatprep.subr.bf16.mxu0 0
    %623 = vmatpush1.bf16.xpose.msra.mxu0 0
    %624 = vmatprep.subr.bf16.mxu0 0
    %625 = vmatpush1.bf16.xpose.msra.mxu0 0
    %626 = vmatprep.subr.bf16.mxu0 0
    %627 = vmatpush1.bf16.xpose.msra.mxu0 0
    %628 = vmatprep.subr.bf16.mxu0 0
    %629 = vmatpush1.bf16.xpose.msra.mxu0 0
    %630 = vmatprep.subr.bf16.mxu0 0
    %631 = vmatpush1.bf16.xpose.msra.mxu0 0
    %632 = vmatprep.subr.bf16.mxu0 0
    %633 = vmatpush1.bf16.xpose.msra.mxu0 0
    %634 = vmatprep.subr.bf16.mxu0 0
    %635 = vmatpush1.bf16.xpose.msra.mxu0 0
    %636 = vmatprep.subr.bf16.mxu0 0
    %637 = vmatpush1.bf16.xpose.msra.mxu0 0
    %638 = vmatprep.subr.bf16.mxu0 0
    %639 = vmatpush1.bf16.xpose.msra.mxu0 0
    %640 = vmatprep.subr.bf16.mxu0 0
    %641 = vmatpush1.bf16.xpose.msra.mxu0 0
    %642 = vmatprep.subr.bf16.mxu0 0
    %643 = vmatpush1.bf16.xpose.msra.mxu0 0
    %644 = vmatprep.subr.bf16.mxu0 0
    %645 = vmatpush1.bf16.xpose.msra.mxu0 0
    %646 = vmatprep.subr.bf16.mxu0 0
    %647 = vmatpush1.bf16.xpose.msra.mxu0 0
    %648 = vmatprep.subr.bf16.mxu0 0
    %649 = vmatpush1.bf16.xpose.msra.mxu0 0
    %650 = vmatprep.mubr.bf16.mxu0 0
    %651 = vmatmul.mubr.bf16.gmra.mrb[0].mxu0 %v613
    %v652 = vpop.f32.mrb[0].mxu0
    %v653 = vadd.f32 0.0, %v652
    %v654 = vpop.f32.mrb[0].mxu0
    %v655 = vpop.f32.mrb[0].mxu0
    %v656 = vpop.f32.mrb[0].mxu0
    %657 = vdwg.mxu0
    %v658 = vmul.f32 %v601, 0.17677669
    %v659 = vmul.f32 %v653, 0.17677669
    %v660 = vsel %vm431, %v658, -inf
    %661 = vmax.xlane.f32.xlu0 %v660
    %v662 = vpop.xlane.xlu0 %661
    %v663 = vsel %vm431, %v659, -inf
    %664 = vmax.xlane.f32.xlu0 %v663
    %v665 = vpop.xlane.xlu0 %664
    %v666 = vsub.f32 %v658, %v662
    %v667 = vsub.f32 %v659, %v665
    %v668 = vmul.f32 %v666, 1.442695
    %v669 = vpow.pop %v668
    %v670 = vmul.f32 %v667, 1.442695
    %v671 = vpow.pop %v670
    %v672 = vsel %vm431, %v669, 0.0
    %673 = vadd.xlane.f32.xlu0 %v672
    %v674 = vpop.xlane.xlu0 %673
    %v675 = vsel %vm431, %v671, 0.0
    %676 = vadd.xlane.f32.xlu0 %v675
    %v677 = vpop.xlane.xlu0 %676
    %v678 = vrcp.pop %v674
    %v679 = vrcp.pop %v677
    %v680 = vmul.f32 %v669, %v678
    %v681 = vmul.f32 %v671, %v679
    %v682 = vpack.c.bf16 %v680, %v680
    %v683 = vpack.c.bf16 %v681, %v681
    %685 = vrot.lane.b32.xlu0 %v335, 96
    %v686 = vpop.permute.xlu0 %685
    %v688 = vsel %vm431, %v682, 0
    %v691 = vsel %vm459, %v686, 0
    %693 = vmatprep.subr.bf16.mxu0 0
    %694 = vmatpush1.bf16.msra.mxu0 %v691
    %695 = vmatprep.subr.bf16.mxu0 0
    %696 = vmatpush1.bf16.msra.mxu0 0
    %697 = vmatprep.subr.bf16.mxu0 0
    %698 = vmatpush1.bf16.msra.mxu0 0
    %699 = vmatprep.subr.bf16.mxu0 0
    %700 = vmatpush1.bf16.msra.mxu0 0
    %701 = vmatprep.subr.bf16.mxu0 0
    %702 = vmatpush1.bf16.msra.mxu0 0
    %703 = vmatprep.subr.bf16.mxu0 0
    %704 = vmatpush1.bf16.msra.mxu0 0
    %705 = vmatprep.subr.bf16.mxu0 0
    %706 = vmatpush1.bf16.msra.mxu0 0
    %707 = vmatprep.subr.bf16.mxu0 0
    %708 = vmatpush1.bf16.msra.mxu0 0
    %709 = vmatprep.subr.bf16.mxu0 0
    %710 = vmatpush1.bf16.msra.mxu0 0
    %711 = vmatprep.subr.bf16.mxu0 0
    %712 = vmatpush1.bf16.msra.mxu0 0
    %713 = vmatprep.subr.bf16.mxu0 0
    %714 = vmatpush1.bf16.msra.mxu0 0
    %715 = vmatprep.subr.bf16.mxu0 0
    %716 = vmatpush1.bf16.msra.mxu0 0
    %717 = vmatprep.subr.bf16.mxu0 0
    %718 = vmatpush1.bf16.msra.mxu0 0
    %719 = vmatprep.subr.bf16.mxu0 0
    %720 = vmatpush1.bf16.msra.mxu0 0
    %721 = vmatprep.subr.bf16.mxu0 0
    %722 = vmatpush1.bf16.msra.mxu0 0
    %723 = vmatprep.subr.bf16.mxu0 0
    %724 = vmatpush1.bf16.msra.mxu0 0
    %725 = vmatprep.mubr.bf16.mxu0 0
    %726 = vmatmul.mubr.bf16.gmra.mrb[0].mxu0 %v688
    %v727 = vpop.f32.mrb[0].mxu0
    %v728 = vadd.f32 0.0, %v727
    %v729 = vpop.f32.mrb[0].mxu0
    %v730 = vpop.f32.mrb[0].mxu0
    %v731 = vpop.f32.mrb[0].mxu0
    %732 = vdwg.mxu0
    %734 = vrot.lane.b32.xlu0 %v336, 96
    %v735 = vpop.permute.xlu0 %734
    %v737 = vsel %vm431, %v683, 0
    %v740 = vsel %vm459, %v735, 0
    %742 = vmatprep.subr.bf16.mxu0 0
    %743 = vmatpush1.bf16.msra.mxu0 %v740
    %744 = vmatprep.subr.bf16.mxu0 0
    %745 = vmatpush1.bf16.msra.mxu0 0
    %746 = vmatprep.subr.bf16.mxu0 0
    %747 = vmatpush1.bf16.msra.mxu0 0
    %748 = vmatprep.subr.bf16.mxu0 0
    %749 = vmatpush1.bf16.msra.mxu0 0
    %750 = vmatprep.subr.bf16.mxu0 0
    %751 = vmatpush1.bf16.msra.mxu0 0
    %752 = vmatprep.subr.bf16.mxu0 0
    %753 = vmatpush1.bf16.msra.mxu0 0
    %754 = vmatprep.subr.bf16.mxu0 0
    %755 = vmatpush1.bf16.msra.mxu0 0
    %756 = vmatprep.subr.bf16.mxu0 0
    %757 = vmatpush1.bf16.msra.mxu0 0
    %758 = vmatprep.subr.bf16.mxu0 0
    %759 = vmatpush1.bf16.msra.mxu0 0
    %760 = vmatprep.subr.bf16.mxu0 0
    %761 = vmatpush1.bf16.msra.mxu0 0
    %762 = vmatprep.subr.bf16.mxu0 0
    %763 = vmatpush1.bf16.msra.mxu0 0
    %764 = vmatprep.subr.bf16.mxu0 0
    %765 = vmatpush1.bf16.msra.mxu0 0
    %766 = vmatprep.subr.bf16.mxu0 0
    %767 = vmatpush1.bf16.msra.mxu0 0
    %768 = vmatprep.subr.bf16.mxu0 0
    %769 = vmatpush1.bf16.msra.mxu0 0
    %770 = vmatprep.subr.bf16.mxu0 0
    %771 = vmatpush1.bf16.msra.mxu0 0
    %772 = vmatprep.subr.bf16.mxu0 0
    %773 = vmatpush1.bf16.msra.mxu0 0
    %774 = vmatprep.mubr.bf16.mxu0 0
    %775 = vmatmul.mubr.bf16.gmra.mrb[0].mxu0 %v737
    %v776 = vpop.f32.mrb[0].mxu0
    %v777 = vadd.f32 0.0, %v776
    %v778 = vpop.f32.mrb[0].mxu0
    %v779 = vpop.f32.mrb[0].mxu0
    %v780 = vpop.f32.mrb[0].mxu0
    %781 = vdwg.mxu0
    %v782 = vpack.c.bf16 %v777, %v728
    %s783 = scalar_lea.vmem %s5, 16
    %v784 = vld [vmem:[%s783] sm:$0xf]
    %v785 = vld [vmem:[%s783 + $0x4] sm:$0xf]
    %v786 = vld [vmem:[%s783 + $0x8] sm:$0xf]
    %v787 = vld [vmem:[%s783 + $0xc] sm:$0xf]
    %v792 = vunpack.c.l.b16 %v784
    %v793 = vunpack.c.l.b16 %v785
    %v794 = vunpack.c.l.b16 %v786
    %v795 = vunpack.c.l.b16 %v787
    %v796 = vpack.c.b16 %v793, %v792
    %v797 = vpack.c.b16 %v795, %v794
    %v801 = vsel %vm143, %v782, 0
    %803 = vmatprep.subr.bf16.mxu0 0
    %804 = vmatpush1.bf16.msra.mxu0 %v796
    %805 = vmatprep.subr.bf16.mxu0 0
    %806 = vmatpush1.bf16.msra.mxu0 %v797
    %807 = vmatprep.subr.bf16.mxu0 0
    %808 = vmatpush1.bf16.msra.mxu0 0
    %809 = vmatprep.subr.bf16.mxu0 0
    %810 = vmatpush1.bf16.msra.mxu0 0
    %811 = vmatprep.subr.bf16.mxu0 0
    %812 = vmatpush1.bf16.msra.mxu0 0
    %813 = vmatprep.subr.bf16.mxu0 0
    %814 = vmatpush1.bf16.msra.mxu0 0
    %815 = vmatprep.subr.bf16.mxu0 0
    %816 = vmatpush1.bf16.msra.mxu0 0
    %817 = vmatprep.subr.bf16.mxu0 0
    %818 = vmatpush1.bf16.msra.mxu0 0
    %819 = vmatprep.subr.bf16.mxu0 0
    %820 = vmatpush1.bf16.msra.mxu0 0
    %821 = vmatprep.subr.bf16.mxu0 0
    %822 = vmatpush1.bf16.msra.mxu0 0
    %823 = vmatprep.subr.bf16.mxu0 0
    %824 = vmatpush1.bf16.msra.mxu0 0
    %825 = vmatprep.subr.bf16.mxu0 0
    %826 = vmatpush1.bf16.msra.mxu0 0
    %827 = vmatprep.subr.bf16.mxu0 0
    %828 = vmatpush1.bf16.msra.mxu0 0
    %829 = vmatprep.subr.bf16.mxu0 0
    %830 = vmatpush1.bf16.msra.mxu0 0
    %831 = vmatprep.subr.bf16.mxu0 0
    %832 = vmatpush1.bf16.msra.mxu0 0
    %833 = vmatprep.subr.bf16.mxu0 0
    %834 = vmatpush1.bf16.msra.mxu0 0
    %835 = vmatprep.mubr.bf16.mxu0 0
    %836 = vmatmul.mubr.bf16.gmra.mrb[0].mxu0 %v801
    %v837 = vpop.f32.mrb[0].mxu0
    %v838 = vadd.f32 0.0, %v837
    %v839 = vpop.f32.mrb[0].mxu0
    %v840 = vpop.f32.mrb[0].mxu0
    %v841 = vadd.f32 0.0, %v840
    %v842 = vpop.f32.mrb[0].mxu0
    %843 = vdwg.mxu0
    %v848 = vunpack.c.l.b16 %v550
    %v849 = vunpack.c.l.b16 %v551
    %v850 = vunpack.c.l.b16 %v552
    %v851 = vunpack.c.l.b16 %v553
    %v852 = vpack.c.b16 %v849, %v848
    %v853 = vpack.c.b16 %v851, %v850
    %v857 = vsel %vm143, %v549, 0
    %859 = vmatprep.subr.bf16.mxu0 0
    %860 = vmatpush1.bf16.msra.mxu0 %v852
    %861 = vmatprep.subr.bf16.mxu0 0
    %862 = vmatpush1.bf16.msra.mxu0 %v853
    %863 = vmatprep.subr.bf16.mxu0 0
    %864 = vmatpush1.bf16.msra.mxu0 0
    %865 = vmatprep.subr.bf16.mxu0 0
    %866 = vmatpush1.bf16.msra.mxu0 0
    %867 = vmatprep.subr.bf16.mxu0 0
    %868 = vmatpush1.bf16.msra.mxu0 0
    %869 = vmatprep.subr.bf16.mxu0 0
    %870 = vmatpush1.bf16.msra.mxu0 0
    %871 = vmatprep.subr.bf16.mxu0 0
    %872 = vmatpush1.bf16.msra.mxu0 0
    %873 = vmatprep.subr.bf16.mxu0 0
    %874 = vmatpush1.bf16.msra.mxu0 0
    %875 = vmatprep.subr.bf16.mxu0 0
    %876 = vmatpush1.bf16.msra.mxu0 0
    %877 = vmatprep.subr.bf16.mxu0 0
    %878 = vmatpush1.bf16.msra.mxu0 0
    %879 = vmatprep.subr.bf16.mxu0 0
    %880 = vmatpush1.bf16.msra.mxu0 0
    %881 = vmatprep.subr.bf16.mxu0 0
    %882 = vmatpush1.bf16.msra.mxu0 0
    %883 = vmatprep.subr.bf16.mxu0 0
    %884 = vmatpush1.bf16.msra.mxu0 0
    %885 = vmatprep.subr.bf16.mxu0 0
    %886 = vmatpush1.bf16.msra.mxu0 0
    %887 = vmatprep.subr.bf16.mxu0 0
    %888 = vmatpush1.bf16.msra.mxu0 0
    %889 = vmatprep.subr.bf16.mxu0 0
    %890 = vmatpush1.bf16.msra.mxu0 0
    %891 = vmatprep.mubr.bf16.mxu0 0
    %892 = vmatmul.mubr.bf16.gmra.mrb[0].mxu0 %v857
    %v893 = vpop.f32.mrb[0].mxu0
    %v894 = vadd.f32 %v838, %v893
    %v895 = vpop.f32.mrb[0].mxu0
    %v896 = vpop.f32.mrb[0].mxu0
    %v897 = vadd.f32 %v841, %v896
    %v898 = vpop.f32.mrb[0].mxu0
    %899 = vdwg.mxu0
    %900 = vrot.lane.b32.xlu0 %v331, 64
    %v901 = vpop.permute.xlu0 %900
    %902 = vrot.lane.b32.xlu0 %v333, 64
    %v903 = vpop.permute.xlu0 %902
    %v905 = vsel %vm143, %v901, 0
    %v908 = vsel %vm143, %v903, 0
    %910 = vmatprep.subr.bf16.mxu0 0
    %911 = vmatpush1.bf16.xpose.msra.mxu0 %v908
    %912 = vmatprep.subr.bf16.mxu0 0
    %913 = vmatpush1.bf16.xpose.msra.mxu0 0
    %914 = vmatprep.subr.bf16.mxu0 0
    %915 = vmatpush1.bf16.xpose.msra.mxu0 0
    %916 = vmatprep.subr.bf16.mxu0 0
    %917 = vmatpush1.bf16.xpose.msra.mxu0 0
    %918 = vmatprep.subr.bf16.mxu0 0
    %919 = vmatpush1.bf16.xpose.msra.mxu0 0
    %920 = vmatprep.subr.bf16.mxu0 0
    %921 = vmatpush1.bf16.xpose.msra.mxu0 0
    %922 = vmatprep.subr.bf16.mxu0 0
    %923 = vmatpush1.bf16.xpose.msra.mxu0 0
    %924 = vmatprep.subr.bf16.mxu0 0
    %925 = vmatpush1.bf16.xpose.msra.mxu0 0
    %926 = vmatprep.subr.bf16.mxu0 0
    %927 = vmatpush1.bf16.xpose.msra.mxu0 0
    %928 = vmatprep.subr.bf16.mxu0 0
    %929 = vmatpush1.bf16.xpose.msra.mxu0 0
    %930 = vmatprep.subr.bf16.mxu0 0
    %931 = vmatpush1.bf16.xpose.msra.mxu0 0
    %932 = vmatprep.subr.bf16.mxu0 0
    %933 = vmatpush1.bf16.xpose.msra.mxu0 0
    %934 = vmatprep.subr.bf16.mxu0 0
    %935 = vmatpush1.bf16.xpose.msra.mxu0 0
    %936 = vmatprep.subr.bf16.mxu0 0
    %937 = vmatpush1.bf16.xpose.msra.mxu0 0
    %938 = vmatprep.subr.bf16.mxu0 0
    %939 = vmatpush1.bf16.xpose.msra.mxu0 0
    %940 = vmatprep.subr.bf16.mxu0 0
    %941 = vmatpush1.bf16.xpose.msra.mxu0 0
    %942 = vmatprep.mubr.bf16.mxu0 0
    %943 = vmatmul.mubr.bf16.gmra.mrb[0].mxu0 %v905
    %v944 = vpop.f32.mrb[0].mxu0
    %v945 = vadd.f32 0.0, %v944
    %v946 = vpop.f32.mrb[0].mxu0
    %v947 = vpop.f32.mrb[0].mxu0
    %v948 = vpop.f32.mrb[0].mxu0
    %949 = vdwg.mxu0
    %950 = vrot.lane.b32.xlu0 %v332, 64
    %v951 = vpop.permute.xlu0 %950
    %952 = vrot.lane.b32.xlu0 %v334, 64
    %v953 = vpop.permute.xlu0 %952
    %v955 = vsel %vm143, %v951, 0
    %v958 = vsel %vm143, %v953, 0
    %960 = vmatprep.subr.bf16.mxu0 0
    %961 = vmatpush1.bf16.xpose.msra.mxu0 %v958
    %962 = vmatprep.subr.bf16.mxu0 0
    %963 = vmatpush1.bf16.xpose.msra.mxu0 0
    %964 = vmatprep.subr.bf16.mxu0 0
    %965 = vmatpush1.bf16.xpose.msra.mxu0 0
    %966 = vmatprep.subr.bf16.mxu0 0
    %967 = vmatpush1.bf16.xpose.msra.mxu0 0
    %968 = vmatprep.subr.bf16.mxu0 0
    %969 = vmatpush1.bf16.xpose.msra.mxu0 0
    %970 = vmatprep.subr.bf16.mxu0 0
    %971 = vmatpush1.bf16.xpose.msra.mxu0 0
    %972 = vmatprep.subr.bf16.mxu0 0
    %973 = vmatpush1.bf16.xpose.msra.mxu0 0
    %974 = vmatprep.subr.bf16.mxu0 0
    %975 = vmatpush1.bf16.xpose.msra.mxu0 0
    %976 = vmatprep.subr.bf16.mxu0 0
    %977 = vmatpush1.bf16.xpose.msra.mxu0 0
    %978 = vmatprep.subr.bf16.mxu0 0
    %979 = vmatpush1.bf16.xpose.msra.mxu0 0
    %980 = vmatprep.subr.bf16.mxu0 0
    %981 = vmatpush1.bf16.xpose.msra.mxu0 0
    %982 = vmatprep.subr.bf16.mxu0 0
    %983 = vmatpush1.bf16.xpose.msra.mxu0 0
    %984 = vmatprep.subr.bf16.mxu0 0
    %985 = vmatpush1.bf16.xpose.msra.mxu0 0
    %986 = vmatprep.subr.bf16.mxu0 0
    %987 = vmatpush1.bf16.xpose.msra.mxu0 0
    %988 = vmatprep.subr.bf16.mxu0 0
    %989 = vmatpush1.bf16.xpose.msra.mxu0 0
    %990 = vmatprep.subr.bf16.mxu0 0
    %991 = vmatpush1.bf16.xpose.msra.mxu0 0
    %992 = vmatprep.mubr.bf16.mxu0 0
    %993 = vmatmul.mubr.bf16.gmra.mrb[0].mxu0 %v955
    %v994 = vpop.f32.mrb[0].mxu0
    %v995 = vadd.f32 0.0, %v994
    %v996 = vpop.f32.mrb[0].mxu0
    %v997 = vpop.f32.mrb[0].mxu0
    %v998 = vpop.f32.mrb[0].mxu0
    %999 = vdwg.mxu0
    %v1000 = vmul.f32 %v945, 0.17677669
    %v1001 = vmul.f32 %v995, 0.17677669
    %v1002 = vsel %vm431, %v1000, -inf
    %1003 = vmax.xlane.f32.xlu0 %v1002
    %v1004 = vpop.xlane.xlu0 %1003
    %v1005 = vsel %vm431, %v1001, -inf
    %1006 = vmax.xlane.f32.xlu0 %v1005
    %v1007 = vpop.xlane.xlu0 %1006
    %v1008 = vsub.f32 %v1000, %v1004
    %v1009 = vsub.f32 %v1001, %v1007
    %v1010 = vmul.f32 %v1008, 1.442695
    %v1011 = vpow.pop %v1010
    %v1012 = vmul.f32 %v1009, 1.442695
    %v1013 = vpow.pop %v1012
    %v1014 = vsel %vm431, %v1011, 0.0
    %1015 = vadd.xlane.f32.xlu0 %v1014
    %v1016 = vpop.xlane.xlu0 %1015
    %v1017 = vsel %vm431, %v1013, 0.0
    %1018 = vadd.xlane.f32.xlu0 %v1017
    %v1019 = vpop.xlane.xlu0 %1018
    %v1020 = vrcp.pop %v1016
    %v1021 = vrcp.pop %v1019
    %v1022 = vmul.f32 %v1011, %v1020
    %v1023 = vmul.f32 %v1013, %v1021
    %v1024 = vpack.c.bf16 %v1022, %v1022
    %v1025 = vpack.c.bf16 %v1023, %v1023
    %1026 = vrot.lane.b32.xlu0 %v335, 64
    %v1027 = vpop.permute.xlu0 %1026
    %v1029 = vsel %vm431, %v1024, 0
    %v1032 = vsel %vm459, %v1027, 0
    %1034 = vmatprep.subr.bf16.mxu0 0
    %1035 = vmatpush1.bf16.msra.mxu0 %v1032
    %1036 = vmatprep.subr.bf16.mxu0 0
    %1037 = vmatpush1.bf16.msra.mxu0 0
    %1038 = vmatprep.subr.bf16.mxu0 0
    %1039 = vmatpush1.bf16.msra.mxu0 0
    %1040 = vmatprep.subr.bf16.mxu0 0
    %1041 = vmatpush1.bf16.msra.mxu0 0
    %1042 = vmatprep.subr.bf16.mxu0 0
    %1043 = vmatpush1.bf16.msra.mxu0 0
    %1044 = vmatprep.subr.bf16.mxu0 0
    %1045 = vmatpush1.bf16.msra.mxu0 0
    %1046 = vmatprep.subr.bf16.mxu0 0
    %1047 = vmatpush1.bf16.msra.mxu0 0
    %1048 = vmatprep.subr.bf16.mxu0 0
    %1049 = vmatpush1.bf16.msra.mxu0 0
    %1050 = vmatprep.subr.bf16.mxu0 0
    %1051 = vmatpush1.bf16.msra.mxu0 0
    %1052 = vmatprep.subr.bf16.mxu0 0
    %1053 = vmatpush1.bf16.msra.mxu0 0
    %1054 = vmatprep.subr.bf16.mxu0 0
    %1055 = vmatpush1.bf16.msra.mxu0 0
    %1056 = vmatprep.subr.bf16.mxu0 0
    %1057 = vmatpush1.bf16.msra.mxu0 0
    %1058 = vmatprep.subr.bf16.mxu0 0
    %1059 = vmatpush1.bf16.msra.mxu0 0
    %1060 = vmatprep.subr.bf16.mxu0 0
    %1061 = vmatpush1.bf16.msra.mxu0 0
    %1062 = vmatprep.subr.bf16.mxu0 0
    %1063 = vmatpush1.bf16.msra.mxu0 0
    %1064 = vmatprep.subr.bf16.mxu0 0
    %1065 = vmatpush1.bf16.msra.mxu0 0
    %1066 = vmatprep.mubr.bf16.mxu0 0
    %1067 = vmatmul.mubr.bf16.gmra.mrb[0].mxu0 %v1029
    %v1068 = vpop.f32.mrb[0].mxu0
    %v1069 = vadd.f32 0.0, %v1068
    %v1070 = vpop.f32.mrb[0].mxu0
    %v1071 = vpop.f32.mrb[0].mxu0
    %v1072 = vpop.f32.mrb[0].mxu0
    %1073 = vdwg.mxu0
    %1074 = vrot.lane.b32.xlu0 %v336, 64
    %v1075 = vpop.permute.xlu0 %1074
    %v1077 = vsel %vm431, %v1025, 0
    %v1080 = vsel %vm459, %v1075, 0
    %1082 = vmatprep.subr.bf16.mxu0 0
    %1083 = vmatpush1.bf16.msra.mxu0 %v1080
    %1084 = vmatprep.subr.bf16.mxu0 0
    %1085 = vmatpush1.bf16.msra.mxu0 0
    %1086 = vmatprep.subr.bf16.mxu0 0
    %1087 = vmatpush1.bf16.msra.mxu0 0
    %1088 = vmatprep.subr.bf16.mxu0 0
    %1089 = vmatpush1.bf16.msra.mxu0 0
    %1090 = vmatprep.subr.bf16.mxu0 0
    %1091 = vmatpush1.bf16.msra.mxu0 0
    %1092 = vmatprep.subr.bf16.mxu0 0
    %1093 = vmatpush1.bf16.msra.mxu0 0
    %1094 = vmatprep.subr.bf16.mxu0 0
    %1095 = vmatpush1.bf16.msra.mxu0 0
    %1096 = vmatprep.subr.bf16.mxu0 0
    %1097 = vmatpush1.bf16.msra.mxu0 0
    %1098 = vmatprep.subr.bf16.mxu0 0
    %1099 = vmatpush1.bf16.msra.mxu0 0
    %1100 = vmatprep.subr.bf16.mxu0 0
    %1101 = vmatpush1.bf16.msra.mxu0 0
    %1102 = vmatprep.subr.bf16.mxu0 0
    %1103 = vmatpush1.bf16.msra.mxu0 0
    %1104 = vmatprep.subr.bf16.mxu0 0
    %1105 = vmatpush1.bf16.msra.mxu0 0
    %1106 = vmatprep.subr.bf16.mxu0 0
    %1107 = vmatpush1.bf16.msra.mxu0 0
    %1108 = vmatprep.subr.bf16.mxu0 0
    %1109 = vmatpush1.bf16.msra.mxu0 0
    %1110 = vmatprep.subr.bf16.mxu0 0
    %1111 = vmatpush1.bf16.msra.mxu0 0
    %1112 = vmatprep.subr.bf16.mxu0 0
    %1113 = vmatpush1.bf16.msra.mxu0 0
    %1114 = vmatprep.mubr.bf16.mxu0 0
    %1115 = vmatmul.mubr.bf16.gmra.mrb[0].mxu0 %v1077
    %v1116 = vpop.f32.mrb[0].mxu0
    %v1117 = vadd.f32 0.0, %v1116
    %v1118 = vpop.f32.mrb[0].mxu0
    %v1119 = vpop.f32.mrb[0].mxu0
    %v1120 = vpop.f32.mrb[0].mxu0
    %1121 = vdwg.mxu0
    %v1122 = vpack.c.bf16 %v1117, %v1069
    %s1123 = scalar_lea.vmem %s5, 32
    %v1124 = vld [vmem:[%s1123] sm:$0xf]
    %v1125 = vld [vmem:[%s1123 + $0x4] sm:$0xf]
    %v1126 = vld [vmem:[%s1123 + $0x8] sm:$0xf]
    %v1127 = vld [vmem:[%s1123 + $0xc] sm:$0xf]
    %v1132 = vunpack.c.l.b16 %v1124
    %v1133 = vunpack.c.l.b16 %v1125
    %v1134 = vunpack.c.l.b16 %v1126
    %v1135 = vunpack.c.l.b16 %v1127
    %v1136 = vpack.c.b16 %v1133, %v1132
    %v1137 = vpack.c.b16 %v1135, %v1134
    %v1141 = vsel %vm143, %v1122, 0
    %1143 = vmatprep.subr.bf16.mxu0 0
    %1144 = vmatpush1.bf16.msra.mxu0 %v1136
    %1145 = vmatprep.subr.bf16.mxu0 0
    %1146 = vmatpush1.bf16.msra.mxu0 %v1137
    %1147 = vmatprep.subr.bf16.mxu0 0
    %1148 = vmatpush1.bf16.msra.mxu0 0
    %1149 = vmatprep.subr.bf16.mxu0 0
    %1150 = vmatpush1.bf16.msra.mxu0 0
    %1151 = vmatprep.subr.bf16.mxu0 0
    %1152 = vmatpush1.bf16.msra.mxu0 0
    %1153 = vmatprep.subr.bf16.mxu0 0
    %1154 = vmatpush1.bf16.msra.mxu0 0
    %1155 = vmatprep.subr.bf16.mxu0 0
    %1156 = vmatpush1.bf16.msra.mxu0 0
    %1157 = vmatprep.subr.bf16.mxu0 0
    %1158 = vmatpush1.bf16.msra.mxu0 0
    %1159 = vmatprep.subr.bf16.mxu0 0
    %1160 = vmatpush1.bf16.msra.mxu0 0
    %1161 = vmatprep.subr.bf16.mxu0 0
    %1162 = vmatpush1.bf16.msra.mxu0 0
    %1163 = vmatprep.subr.bf16.mxu0 0
    %1164 = vmatpush1.bf16.msra.mxu0 0
    %1165 = vmatprep.subr.bf16.mxu0 0
    %1166 = vmatpush1.bf16.msra.mxu0 0
    %1167 = vmatprep.subr.bf16.mxu0 0
    %1168 = vmatpush1.bf16.msra.mxu0 0
    %1169 = vmatprep.subr.bf16.mxu0 0
    %1170 = vmatpush1.bf16.msra.mxu0 0
    %1171 = vmatprep.subr.bf16.mxu0 0
    %1172 = vmatpush1.bf16.msra.mxu0 0
    %1173 = vmatprep.subr.bf16.mxu0 0
    %1174 = vmatpush1.bf16.msra.mxu0 0
    %1175 = vmatprep.mubr.bf16.mxu0 0
    %1176 = vmatmul.mubr.bf16.gmra.mrb[0].mxu0 %v1141
    %v1177 = vpop.f32.mrb[0].mxu0
    %v1178 = vadd.f32 0.0, %v1177
    %v1179 = vpop.f32.mrb[0].mxu0
    %v1180 = vpop.f32.mrb[0].mxu0
    %v1181 = vadd.f32 0.0, %v1180
    %v1182 = vpop.f32.mrb[0].mxu0
    %1183 = vdwg.mxu0
    %v1184 = vadd.f32 %v894, %v1178
    %v1185 = vadd.f32 %v897, %v1181
    %1186 = vrot.lane.b32.xlu0 %v331, 32
    %v1187 = vpop.permute.xlu0 %1186
    %1188 = vrot.lane.b32.xlu0 %v333, 32
    %v1189 = vpop.permute.xlu0 %1188
    %v1191 = vsel %vm143, %v1187, 0
    %v1194 = vsel %vm143, %v1189, 0
    %1196 = vmatprep.subr.bf16.mxu0 0
    %1197 = vmatpush1.bf16.xpose.msra.mxu0 %v1194
    %1198 = vmatprep.subr.bf16.mxu0 0
    %1199 = vmatpush1.bf16.xpose.msra.mxu0 0
    %1200 = vmatprep.subr.bf16.mxu0 0
    %1201 = vmatpush1.bf16.xpose.msra.mxu0 0
    %1202 = vmatprep.subr.bf16.mxu0 0
    %1203 = vmatpush1.bf16.xpose.msra.mxu0 0
    %1204 = vmatprep.subr.bf16.mxu0 0
    %1205 = vmatpush1.bf16.xpose.msra.mxu0 0
    %1206 = vmatprep.subr.bf16.mxu0 0
    %1207 = vmatpush1.bf16.xpose.msra.mxu0 0
    %1208 = vmatprep.subr.bf16.mxu0 0
    %1209 = vmatpush1.bf16.xpose.msra.mxu0 0
    %1210 = vmatprep.subr.bf16.mxu0 0
    %1211 = vmatpush1.bf16.xpose.msra.mxu0 0
    %1212 = vmatprep.subr.bf16.mxu0 0
    %1213 = vmatpush1.bf16.xpose.msra.mxu0 0
    %1214 = vmatprep.subr.bf16.mxu0 0
    %1215 = vmatpush1.bf16.xpose.msra.mxu0 0
    %1216 = vmatprep.subr.bf16.mxu0 0
    %1217 = vmatpush1.bf16.xpose.msra.mxu0 0
    %1218 = vmatprep.subr.bf16.mxu0 0
    %1219 = vmatpush1.bf16.xpose.msra.mxu0 0
    %1220 = vmatprep.subr.bf16.mxu0 0
    %1221 = vmatpush1.bf16.xpose.msra.mxu0 0
    %1222 = vmatprep.subr.bf16.mxu0 0
    %1223 = vmatpush1.bf16.xpose.msra.mxu0 0
    %1224 = vmatprep.subr.bf16.mxu0 0
    %1225 = vmatpush1.bf16.xpose.msra.mxu0 0
    %1226 = vmatprep.subr.bf16.mxu0 0
    %1227 = vmatpush1.bf16.xpose.msra.mxu0 0
    %1228 = vmatprep.mubr.bf16.mxu0 0
    %1229 = vmatmul.mubr.bf16.gmra.mrb[0].mxu0 %v1191
    %v1230 = vpop.f32.mrb[0].mxu0
    %v1231 = vadd.f32 0.0, %v1230
    %v1232 = vpop.f32.mrb[0].mxu0
    %v1233 = vpop.f32.mrb[0].mxu0
    %v1234 = vpop.f32.mrb[0].mxu0
    %1235 = vdwg.mxu0
    %1236 = vrot.lane.b32.xlu0 %v332, 32
    %v1237 = vpop.permute.xlu0 %1236
    %1238 = vrot.lane.b32.xlu0 %v334, 32
    %v1239 = vpop.permute.xlu0 %1238
    %v1241 = vsel %vm143, %v1237, 0
    %v1244 = vsel %vm143, %v1239, 0
    %1246 = vmatprep.subr.bf16.mxu0 0
    %1247 = vmatpush1.bf16.xpose.msra.mxu0 %v1244
    %1248 = vmatprep.subr.bf16.mxu0 0
    %1249 = vmatpush1.bf16.xpose.msra.mxu0 0
    %1250 = vmatprep.subr.bf16.mxu0 0
    %1251 = vmatpush1.bf16.xpose.msra.mxu0 0
    %1252 = vmatprep.subr.bf16.mxu0 0
    %1253 = vmatpush1.bf16.xpose.msra.mxu0 0
    %1254 = vmatprep.subr.bf16.mxu0 0
    %1255 = vmatpush1.bf16.xpose.msra.mxu0 0
    %1256 = vmatprep.subr.bf16.mxu0 0
    %1257 = vmatpush1.bf16.xpose.msra.mxu0 0
    %1258 = vmatprep.subr.bf16.mxu0 0
    %1259 = vmatpush1.bf16.xpose.msra.mxu0 0
    %1260 = vmatprep.subr.bf16.mxu0 0
    %1261 = vmatpush1.bf16.xpose.msra.mxu0 0
    %1262 = vmatprep.subr.bf16.mxu0 0
    %1263 = vmatpush1.bf16.xpose.msra.mxu0 0
    %1264 = vmatprep.subr.bf16.mxu0 0
    %1265 = vmatpush1.bf16.xpose.msra.mxu0 0
    %1266 = vmatprep.subr.bf16.mxu0 0
    %1267 = vmatpush1.bf16.xpose.msra.mxu0 0
    %1268 = vmatprep.subr.bf16.mxu0 0
    %1269 = vmatpush1.bf16.xpose.msra.mxu0 0
    %1270 = vmatprep.subr.bf16.mxu0 0
    %1271 = vmatpush1.bf16.xpose.msra.mxu0 0
    %1272 = vmatprep.subr.bf16.mxu0 0
    %1273 = vmatpush1.bf16.xpose.msra.mxu0 0
    %1274 = vmatprep.subr.bf16.mxu0 0
    %1275 = vmatpush1.bf16.xpose.msra.mxu0 0
    %1276 = vmatprep.subr.bf16.mxu0 0
    %1277 = vmatpush1.bf16.xpose.msra.mxu0 0
    %1278 = vmatprep.mubr.bf16.mxu0 0
    %1279 = vmatmul.mubr.bf16.gmra.mrb[0].mxu0 %v1241
    %v1280 = vpop.f32.mrb[0].mxu0
    %v1281 = vadd.f32 0.0, %v1280
    %v1282 = vpop.f32.mrb[0].mxu0
    %v1283 = vpop.f32.mrb[0].mxu0
    %v1284 = vpop.f32.mrb[0].mxu0
    %1285 = vdwg.mxu0
    %v1286 = vmul.f32 %v1231, 0.17677669
    %v1287 = vmul.f32 %v1281, 0.17677669
    %v1288 = vsel %vm431, %v1286, -inf
    %1289 = vmax.xlane.f32.xlu0 %v1288
    %v1290 = vpop.xlane.xlu0 %1289
    %v1291 = vsel %vm431, %v1287, -inf
    %1292 = vmax.xlane.f32.xlu0 %v1291
    %v1293 = vpop.xlane.xlu0 %1292
    %v1294 = vsub.f32 %v1286, %v1290
    %v1295 = vsub.f32 %v1287, %v1293
    %v1296 = vmul.f32 %v1294, 1.442695
    %v1297 = vpow.pop %v1296
    %v1298 = vmul.f32 %v1295, 1.442695
    %v1299 = vpow.pop %v1298
    %v1300 = vsel %vm431, %v1297, 0.0
    %1301 = vadd.xlane.f32.xlu0 %v1300
    %v1302 = vpop.xlane.xlu0 %1301
    %v1303 = vsel %vm431, %v1299, 0.0
    %1304 = vadd.xlane.f32.xlu0 %v1303
    %v1305 = vpop.xlane.xlu0 %1304
    %v1306 = vrcp.pop %v1302
    %v1307 = vrcp.pop %v1305
    %v1308 = vmul.f32 %v1297, %v1306
    %v1309 = vmul.f32 %v1299, %v1307
    %v1310 = vpack.c.bf16 %v1308, %v1308
    %v1311 = vpack.c.bf16 %v1309, %v1309
    %1312 = vrot.lane.b32.xlu0 %v335, 32
    %v1313 = vpop.permute.xlu0 %1312
    %v1315 = vsel %vm431, %v1310, 0
    %v1318 = vsel %vm459, %v1313, 0
    %1320 = vmatprep.subr.bf16.mxu0 0
    %1321 = vmatpush1.bf16.msra.mxu0 %v1318
    %1322 = vmatprep.subr.bf16.mxu0 0
    %1323 = vmatpush1.bf16.msra.mxu0 0
    %1324 = vmatprep.subr.bf16.mxu0 0
    %1325 = vmatpush1.bf16.msra.mxu0 0
    %1326 = vmatprep.subr.bf16.mxu0 0
    %1327 = vmatpush1.bf16.msra.mxu0 0
    %1328 = vmatprep.subr.bf16.mxu0 0
    %1329 = vmatpush1.bf16.msra.mxu0 0
    %1330 = vmatprep.subr.bf16.mxu0 0
    %1331 = vmatpush1.bf16.msra.mxu0 0
    %1332 = vmatprep.subr.bf16.mxu0 0
    %1333 = vmatpush1.bf16.msra.mxu0 0
    %1334 = vmatprep.subr.bf16.mxu0 0
    %1335 = vmatpush1.bf16.msra.mxu0 0
    %1336 = vmatprep.subr.bf16.mxu0 0
    %1337 = vmatpush1.bf16.msra.mxu0 0
    %1338 = vmatprep.subr.bf16.mxu0 0
    %1339 = vmatpush1.bf16.msra.mxu0 0
    %1340 = vmatprep.subr.bf16.mxu0 0
    %1341 = vmatpush1.bf16.msra.mxu0 0
    %1342 = vmatprep.subr.bf16.mxu0 0
    %1343 = vmatpush1.bf16.msra.mxu0 0
    %1344 = vmatprep.subr.bf16.mxu0 0
    %1345 = vmatpush1.bf16.msra.mxu0 0
    %1346 = vmatprep.subr.bf16.mxu0 0
    %1347 = vmatpush1.bf16.msra.mxu0 0
    %1348 = vmatprep.subr.bf16.mxu0 0
    %1349 = vmatpush1.bf16.msra.mxu0 0
    %1350 = vmatprep.subr.bf16.mxu0 0
    %1351 = vmatpush1.bf16.msra.mxu0 0
    %1352 = vmatprep.mubr.bf16.mxu0 0
    %1353 = vmatmul.mubr.bf16.gmra.mrb[0].mxu0 %v1315
    %v1354 = vpop.f32.mrb[0].mxu0
    %v1355 = vadd.f32 0.0, %v1354
    %v1356 = vpop.f32.mrb[0].mxu0
    %v1357 = vpop.f32.mrb[0].mxu0
    %v1358 = vpop.f32.mrb[0].mxu0
    %1359 = vdwg.mxu0
    %1360 = vrot.lane.b32.xlu0 %v336, 32
    %v1361 = vpop.permute.xlu0 %1360
    %v1363 = vsel %vm431, %v1311, 0
    %v1366 = vsel %vm459, %v1361, 0
    %1368 = vmatprep.subr.bf16.mxu0 0
    %1369 = vmatpush1.bf16.msra.mxu0 %v1366
    %1370 = vmatprep.subr.bf16.mxu0 0
    %1371 = vmatpush1.bf16.msra.mxu0 0
    %1372 = vmatprep.subr.bf16.mxu0 0
    %1373 = vmatpush1.bf16.msra.mxu0 0
    %1374 = vmatprep.subr.bf16.mxu0 0
    %1375 = vmatpush1.bf16.msra.mxu0 0
    %1376 = vmatprep.subr.bf16.mxu0 0
    %1377 = vmatpush1.bf16.msra.mxu0 0
    %1378 = vmatprep.subr.bf16.mxu0 0
    %1379 = vmatpush1.bf16.msra.mxu0 0
    %1380 = vmatprep.subr.bf16.mxu0 0
    %1381 = vmatpush1.bf16.msra.mxu0 0
    %1382 = vmatprep.subr.bf16.mxu0 0
    %1383 = vmatpush1.bf16.msra.mxu0 0
    %1384 = vmatprep.subr.bf16.mxu0 0
    %1385 = vmatpush1.bf16.msra.mxu0 0
    %1386 = vmatprep.subr.bf16.mxu0 0
    %1387 = vmatpush1.bf16.msra.mxu0 0
    %1388 = vmatprep.subr.bf16.mxu0 0
    %1389 = vmatpush1.bf16.msra.mxu0 0
    %1390 = vmatprep.subr.bf16.mxu0 0
    %1391 = vmatpush1.bf16.msra.mxu0 0
    %1392 = vmatprep.subr.bf16.mxu0 0
    %1393 = vmatpush1.bf16.msra.mxu0 0
    %1394 = vmatprep.subr.bf16.mxu0 0
    %1395 = vmatpush1.bf16.msra.mxu0 0
    %1396 = vmatprep.subr.bf16.mxu0 0
    %1397 = vmatpush1.bf16.msra.mxu0 0
    %1398 = vmatprep.subr.bf16.mxu0 0
    %1399 = vmatpush1.bf16.msra.mxu0 0
    %1400 = vmatprep.mubr.bf16.mxu0 0
    %1401 = vmatmul.mubr.bf16.gmra.mrb[0].mxu0 %v1363
    %v1402 = vpop.f32.mrb[0].mxu0
    %v1403 = vadd.f32 0.0, %v1402
    %v1404 = vpop.f32.mrb[0].mxu0
    %v1405 = vpop.f32.mrb[0].mxu0
    %v1406 = vpop.f32.mrb[0].mxu0
    %1407 = vdwg.mxu0
    %v1408 = vpack.c.bf16 %v1403, %v1355
    %s1409 = scalar_lea.vmem %s5, 48
    %v1410 = vld [vmem:[%s1409] sm:$0xf]
    %v1411 = vld [vmem:[%s1409 + $0x4] sm:$0xf]
    %v1412 = vld [vmem:[%s1409 + $0x8] sm:$0xf]
    %v1413 = vld [vmem:[%s1409 + $0xc] sm:$0xf]
    %v1418 = vunpack.c.l.b16 %v1410
    %v1419 = vunpack.c.l.b16 %v1411
    %v1420 = vunpack.c.l.b16 %v1412
    %v1421 = vunpack.c.l.b16 %v1413
    %v1422 = vpack.c.b16 %v1419, %v1418
    %v1423 = vpack.c.b16 %v1421, %v1420
    %v1427 = vsel %vm143, %v1408, 0
    %1429 = vmatprep.subr.bf16.mxu0 0
    %1430 = vmatpush1.bf16.msra.mxu0 %v1422
    %1431 = vmatprep.subr.bf16.mxu0 0
    %1432 = vmatpush1.bf16.msra.mxu0 %v1423
    %1433 = vmatprep.subr.bf16.mxu0 0
    %1434 = vmatpush1.bf16.msra.mxu0 0
    %1435 = vmatprep.subr.bf16.mxu0 0
    %1436 = vmatpush1.bf16.msra.mxu0 0
    %1437 = vmatprep.subr.bf16.mxu0 0
    %1438 = vmatpush1.bf16.msra.mxu0 0
    %1439 = vmatprep.subr.bf16.mxu0 0
    %1440 = vmatpush1.bf16.msra.mxu0 0
    %1441 = vmatprep.subr.bf16.mxu0 0
    %1442 = vmatpush1.bf16.msra.mxu0 0
    %1443 = vmatprep.subr.bf16.mxu0 0
    %1444 = vmatpush1.bf16.msra.mxu0 0
    %1445 = vmatprep.subr.bf16.mxu0 0
    %1446 = vmatpush1.bf16.msra.mxu0 0
    %1447 = vmatprep.subr.bf16.mxu0 0
    %1448 = vmatpush1.bf16.msra.mxu0 0
    %1449 = vmatprep.subr.bf16.mxu0 0
    %1450 = vmatpush1.bf16.msra.mxu0 0
    %1451 = vmatprep.subr.bf16.mxu0 0
    %1452 = vmatpush1.bf16.msra.mxu0 0
    %1453 = vmatprep.subr.bf16.mxu0 0
    %1454 = vmatpush1.bf16.msra.mxu0 0
    %1455 = vmatprep.subr.bf16.mxu0 0
    %1456 = vmatpush1.bf16.msra.mxu0 0
    %1457 = vmatprep.subr.bf16.mxu0 0
    %1458 = vmatpush1.bf16.msra.mxu0 0
    %1459 = vmatprep.subr.bf16.mxu0 0
    %1460 = vmatpush1.bf16.msra.mxu0 0
    %1461 = vmatprep.mubr.bf16.mxu0 0
    %1462 = vmatmul.mubr.bf16.gmra.mrb[0].mxu0 %v1427
    %v1463 = vpop.f32.mrb[0].mxu0
    %v1464 = vadd.f32 0.0, %v1463
    %v1465 = vpop.f32.mrb[0].mxu0
    %v1466 = vpop.f32.mrb[0].mxu0
    %v1467 = vadd.f32 0.0, %v1466
    %v1468 = vpop.f32.mrb[0].mxu0
    %1469 = vdwg.mxu0
    %v1470 = vadd.f32 %v1184, %v1464
    %v1471 = vadd.f32 %v1185, %v1467
    %v1473 = vlaneseq
    %v1474 = vshrl.u32 %v1473, 7
    %v1475 = vsub.s32 0, %v1474
    %v1476 = vrot.slane %v140, %v1475
    %v1478 = vadd.f32 %v1470, %v1476
    %v1479 = vadd.f32 %v1471, %v1476
    %v1480 = vadd.f32 %v1478, %v133
    %v1481 = vadd.f32 %v1479, %v134
    %v1482 = vsel %vm143, %v1480, 0.0
    %1483 = vadd.xlane.f32.xlu0 %v1482
    %v1484 = vpop.xlane.xlu0 %1483
    %v1485 = vsel %vm143, %v1481, 0.0
    %1486 = vadd.xlane.f32.xlu0 %v1485
    %v1487 = vpop.xlane.xlu0 %1486
    %v1488 = vmul.f32 %v1484, %v150
    %v1489 = vmul.f32 %v1487, %v150
    %v1490 = vsub.f32 %v1480, %v1488
    %v1491 = vsub.f32 %v1481, %v1489
    %v1492 = vmul.f32 %v1490, %v1490
    %v1493 = vmul.f32 %v1491, %v1491
    %v1494 = vsel %vm143, %v1492, 0.0
    %1495 = vadd.xlane.f32.xlu0 %v1494
    %v1496 = vpop.xlane.xlu0 %1495
    %v1497 = vsel %vm143, %v1493, 0.0
    %1498 = vadd.xlane.f32.xlu0 %v1497
    %v1499 = vpop.xlane.xlu0 %1498
    %v1500 = vmul.f32 %v1496, %v150
    %v1501 = vmul.f32 %v1499, %v150
    %v1502 = vadd.f32 %v1500, 1e-05
    %v1503 = vadd.f32 %v1501, 1e-05
    %v1504 = vrsqrt.pop %v1502
    %v1505 = vrsqrt.pop %v1503
    %v1506 = vmul.f32 %v1490, %v1504
    %v1507 = vmul.f32 %v1491, %v1505
    %v1509 = vlaneseq
    %v1510 = vshrl.u32 %v1509, 7
    %v1511 = vsub.s32 0, %v1510
    %v1512 = vrot.slane %v137, %v1511
    %v1514 = vmul.f32 %v1506, %v1512
    %v1515 = vmul.f32 %v1507, %v1512
    %v1517 = vlaneseq
    %v1518 = vshrl.u32 %v1517, 7
    %v1519 = vsub.s32 0, %v1518
    %v1520 = vrot.slane %v138, %v1519
    %v1522 = vadd.f32 %v1514, %v1520
    %v1523 = vadd.f32 %v1515, %v1520
    %v1524 = vpack.c.bf16 %v1523, %v1522
    %v1525 = vld [vmem:[#allocation13] sm:$0xf]
    %v1526 = vld [vmem:[#allocation13 + $0x4] sm:$0xf]
    %v1527 = vld [vmem:[#allocation13 + $0x8] sm:$0xf]
    %v1528 = vld [vmem:[#allocation13 + $0xc] sm:$0xf]
    %v1530 = vlaneseq
    %v1531 = vshrl.u32 %v1530, 7
    %v1532 = vsub.s32 0, %v1531
    %v1533 = vrot.slane %v141, %v1532
    %v1539 = vunpack.c.l.b16 %v1525
    %v1540 = vunpack.c.l.b16 %v1526
    %v1541 = vunpack.c.l.b16 %v1527
    %v1542 = vunpack.c.l.b16 %v1528
    %v1543 = vpack.c.b16 %v1540, %v1539
    %v1544 = vpack.c.b16 %v1542, %v1541
    %v1548 = vsel %vm143, %v1524, 0
    %1550 = vmatprep.subr.bf16.mxu0 0
    %1551 = vmatpush1.bf16.msra.mxu0 %v1543
    %1552 = vmatprep.subr.bf16.mxu0 0
    %1553 = vmatpush1.bf16.msra.mxu0 %v1544
    %1554 = vmatprep.subr.bf16.mxu0 0
    %1555 = vmatpush1.bf16.msra.mxu0 0
    %1556 = vmatprep.subr.bf16.mxu0 0
    %1557 = vmatpush1.bf16.msra.mxu0 0
    %1558 = vmatprep.subr.bf16.mxu0 0
    %1559 = vmatpush1.bf16.msra.mxu0 0
    %1560 = vmatprep.subr.bf16.mxu0 0
    %1561 = vmatpush1.bf16.msra.mxu0 0
    %1562 = vmatprep.subr.bf16.mxu0 0
    %1563 = vmatpush1.bf16.msra.mxu0 0
    %1564 = vmatprep.subr.bf16.mxu0 0
    %1565 = vmatpush1.bf16.msra.mxu0 0
    %1566 = vmatprep.subr.bf16.mxu0 0
    %1567 = vmatpush1.bf16.msra.mxu0 0
    %1568 = vmatprep.subr.bf16.mxu0 0
    %1569 = vmatpush1.bf16.msra.mxu0 0
    %1570 = vmatprep.subr.bf16.mxu0 0
    %1571 = vmatpush1.bf16.msra.mxu0 0
    %1572 = vmatprep.subr.bf16.mxu0 0
    %1573 = vmatpush1.bf16.msra.mxu0 0
    %1574 = vmatprep.subr.bf16.mxu0 0
    %1575 = vmatpush1.bf16.msra.mxu0 0
    %1576 = vmatprep.subr.bf16.mxu0 0
    %1577 = vmatpush1.bf16.msra.mxu0 0
    %1578 = vmatprep.subr.bf16.mxu0 0
    %1579 = vmatpush1.bf16.msra.mxu0 0
    %1580 = vmatprep.subr.bf16.mxu0 0
    %1581 = vmatpush1.bf16.msra.mxu0 0
    %1582 = vmatprep.mubr.bf16.mxu0 0
    %1583 = vmatmul.mubr.bf16.gmra.mrb[0].mxu0 %v1548
    %v1584 = vpop.f32.mrb[0].mxu0
    %v1585 = vadd.f32 %v1533, %v1584
    %v1586 = vpop.f32.mrb[0].mxu0
    %v1587 = vpop.f32.mrb[0].mxu0
    %v1588 = vadd.f32 %v1533, %v1587
    %v1589 = vpop.f32.mrb[0].mxu0
    %1590 = vdwg.mxu0
    %v1591 = vmax.f32 %v1585, 0.0
    %v1592 = vmax.f32 %v1588, 0.0
    %v1593 = vpack.c.bf16 %v1592, %v1591
    %v1594 = vld [vmem:[%s11] sm:$0xf]
    %v1595 = vld [vmem:[%s11 + $0x4] sm:$0xf]
    %v1596 = vld [vmem:[%s11 + $0x8] sm:$0xf]
    %v1597 = vld [vmem:[%s11 + $0xc] sm:$0xf]
    %v1598 = vld [vmem:[%s11 + $0x10] sm:$0xf]
    %v1599 = vld [vmem:[%s11 + $0x14] sm:$0xf]
    %v1600 = vld [vmem:[%s11 + $0x18] sm:$0xf]
    %v1601 = vld [vmem:[%s11 + $0x1c] sm:$0xf]
    %v1603 = vlaneseq
    %v1604 = vshrl.u32 %v1603, 7
    %v1605 = vsub.s32 0, %v1604
    %v1606 = vrot.slane %v142, %v1605
    %v1616 = vunpack.c.l.b16 %v1594
    %v1617 = vunpack.c.l.b16 %v1595
    %v1618 = vunpack.c.l.b16 %v1596
    %v1619 = vunpack.c.l.b16 %v1597
    %v1620 = vunpack.c.l.b16 %v1598
    %v1621 = vunpack.c.l.b16 %v1599
    %v1622 = vunpack.c.l.b16 %v1600
    %v1623 = vunpack.c.l.b16 %v1601
    %v1624 = vpack.c.b16 %v1617, %v1616
    %v1625 = vpack.c.b16 %v1619, %v1618
    %v1626 = vpack.c.b16 %v1621, %v1620
    %v1627 = vpack.c.b16 %v1623, %v1622
    %vm1632 = vcmask 523264
    %v1634 = vsel %vm1632, %v1593, 0
    %1636 = vmatprep.subr.bf16.mxu0 0
    %1637 = vmatpush1.bf16.msra.mxu0 %v1624
    %1638 = vmatprep.subr.bf16.mxu0 0
    %1639 = vmatpush1.bf16.msra.mxu0 %v1625
    %1640 = vmatprep.subr.bf16.mxu0 0
    %1641 = vmatpush1.bf16.msra.mxu0 %v1626
    %1642 = vmatprep.subr.bf16.mxu0 0
    %1643 = vmatpush1.bf16.msra.mxu0 %v1627
    %1644 = vmatprep.subr.bf16.mxu0 0
    %1645 = vmatpush1.bf16.msra.mxu0 0
    %1646 = vmatprep.subr.bf16.mxu0 0
    %1647 = vmatpush1.bf16.msra.mxu0 0
    %1648 = vmatprep.subr.bf16.mxu0 0
    %1649 = vmatpush1.bf16.msra.mxu0 0
    %1650 = vmatprep.subr.bf16.mxu0 0
    %1651 = vmatpush1.bf16.msra.mxu0 0
    %1652 = vmatprep.subr.bf16.mxu0 0
    %1653 = vmatpush1.bf16.msra.mxu0 0
    %1654 = vmatprep.subr.bf16.mxu0 0
    %1655 = vmatpush1.bf16.msra.mxu0 0
    %1656 = vmatprep.subr.bf16.mxu0 0
    %1657 = vmatpush1.bf16.msra.mxu0 0
    %1658 = vmatprep.subr.bf16.mxu0 0
    %1659 = vmatpush1.bf16.msra.mxu0 0
    %1660 = vmatprep.subr.bf16.mxu0 0
    %1661 = vmatpush1.bf16.msra.mxu0 0
    %1662 = vmatprep.subr.bf16.mxu0 0
    %1663 = vmatpush1.bf16.msra.mxu0 0
    %1664 = vmatprep.subr.bf16.mxu0 0
    %1665 = vmatpush1.bf16.msra.mxu0 0
    %1666 = vmatprep.subr.bf16.mxu0 0
    %1667 = vmatpush1.bf16.msra.mxu0 0
    %1668 = vmatprep.mubr.bf16.mxu0 0
    %1669 = vmatmul.mubr.bf16.gmra.mrb[0].mxu0 %v1634
    %v1670 = vpop.f32.mrb[0].mxu0
    %v1671 = vadd.f32 %v1606, %v1670
    %v1672 = vpop.f32.mrb[0].mxu0
    %v1673 = vpop.f32.mrb[0].mxu0
    %v1674 = vadd.f32 %v1606, %v1673
    %v1675 = vpop.f32.mrb[0].mxu0
    %1676 = vdwg.mxu0
    %v1677 = vadd.f32 %v1671, %v1480
    %v1678 = vadd.f32 %v1674, %v1481
    %1679 = vst.msk [vmem:[#allocation14] sm:$0xff] %vm143, %v1677
    %1680 = vst.msk [vmem:[#allocation14 + $0x8] sm:$0xff] %vm143, %v1678
    // Predicated region
    $region82: #{tpu_custom_call.1} parent=1 // pred_check
      _
    $region83: #{tpu_custom_call.1} parent=1 // pred_check_branch
      %1682 = sbr.rel (0) target = $region85
    $region84: #{tpu_custom_call.1} parent=1 // pred_region
      %s1684 = ssub.s32 256, 256
      %1685 = vsyncadd [#allocation4], %s1684
      %s1686 = sshll.u32 [#allocation14], 4
      %s1687 = int_to_ptr.vmem [resolvable:$true] %s1686
      %1692 = dma.vmem_to_hbm [thread:$0]  %s1687, 256, %s13, [#allocation4], 128, 128, 8
    $region85: #{tpu_custom_call.1} parent=1 // pred_fallthru
      _
    // Predicated region
    $region86: #{tpu_custom_call.1} parent=1 // pred_check
      _
    $region87: #{tpu_custom_call.1} parent=1 // pred_check_branch
      %1694 = sbr.rel (0) target = $region89
    $region88: #{tpu_custom_call.1} parent=1 // pred_region
      %1695 = dma.done [#allocation4], 256
    $region89: #{tpu_custom_call.1} parent=1 // pred_fallthru
      _
    %1696 = vsyncpa [#allocation3], 1
    %1697 = vsyncpa [#allocation6], 1
    %1698 = vsyncpa [#allocation9], 1
    %1699 = vsyncpa [#allocation12], 1
    %1700 = vsyncpa [#allocation4], 1

</llo_original>
